<compile_context>
chip_gen: v6e
topology: v6e:2x2x1
jax: 0.10.0
libtpu: 0.0.40
codegen_flags: <defaults>
</compile_context>

<pallas_src>
import functools

import jax
import jax.numpy as jnp
from jax.experimental import pallas as pl
from jax.experimental.pallas import tpu as pltpu

EPS = 1e-5


# ---------------------------------------------------------------------------
# Kernels. Data refs are channel-major tiles (C, TL): channels on sublanes,
# the big H*W axis on the 128-lane dimension (lane-dense loads and stores).
# ---------------------------------------------------------------------------
def _lane_mask(hw, tl):
    """(1, TL) mask of lanes that fall inside the real spatial extent."""
    lane = jax.lax.broadcasted_iota(jnp.int32, (1, tl), 1) + pl.program_id(1) * tl
    return lane < hw


def _stats_kernel(hw, tl, need_mask,
                  g_ref, x_ref, wg_ref, wx_ref,
                  sg1_ref, sg2_ref, sx1_ref, sx2_ref):
    """Pass 1: per-channel sum / sum-of-squares of W_g@g and W_x@x (per batch)."""
    @pl.when(pl.program_id(1) == 0)
    def _init():
        sg1_ref[...] = jnp.zeros_like(sg1_ref)
        sg2_ref[...] = jnp.zeros_like(sg2_ref)
        sx1_ref[...] = jnp.zeros_like(sx1_ref)
        sx2_ref[...] = jnp.zeros_like(sx2_ref)

    yg = jnp.dot(wg_ref[...], g_ref[...], preferred_element_type=jnp.float32)
    yx = jnp.dot(wx_ref[...], x_ref[...], preferred_element_type=jnp.float32)
    if need_mask:
        m = _lane_mask(hw, tl)
        yg = jnp.where(m, yg, 0.0)
        yx = jnp.where(m, yx, 0.0)
    sg1_ref[...] += jnp.sum(yg, axis=1, keepdims=True)
    sg2_ref[...] += jnp.sum(yg * yg, axis=1, keepdims=True)
    sx1_ref[...] += jnp.sum(yx, axis=1, keepdims=True)
    sx2_ref[...] += jnp.sum(yx * yx, axis=1, keepdims=True)


def _psi_stats_kernel(hw, tl, need_mask,
                      g_ref, x_ref, wfg_ref, wfx_ref, bf_ref, wp_ref,
                      q_ref, q1_ref, q2_ref):
    """Pass 2: emit the pre-BN psi logit q (lane-dense) + its batch sums."""
    @pl.when(pl.program_id(1) == 0)
    def _init():
        q1_ref[...] = jnp.zeros_like(q1_ref)
        q2_ref[...] = jnp.zeros_like(q2_ref)

    a = jnp.dot(wfg_ref[...], g_ref[...], preferred_element_type=jnp.float32)
    a = a + jnp.dot(wfx_ref[...], x_ref[...], preferred_element_type=jnp.float32)
    a = jnp.maximum(a + bf_ref[...], 0.0)                       # (F_int, TL)
    # psi conv (F_int -> 1) as VPU multiply + sublane (XLU) reduce -> (1, TL)
    q = jnp.sum(a * wp_ref[...], axis=0, keepdims=True)
    q_ref[...] = q                      # out-of-bounds lanes of the last tile
                                        # are dropped by the output DMA
    if need_mask:
        q = jnp.where(_lane_mask(hw, tl), q, 0.0)
    q1_ref[...] += jnp.sum(q, axis=1, keepdims=True)
    q2_ref[...] += jnp.sum(q * q, axis=1, keepdims=True)


def _gate_kernel(x_ref, q_ref, sp_ref, bp_ref, o_ref):
    """Pass 3: psi = sigmoid(s_p * q + b_p); out = x * psi. No matmuls."""
    psi = jax.nn.sigmoid(q_ref[...] * sp_ref[...] + bp_ref[...])      # (1, TL)
    o_ref[...] = (x_ref[...].astype(jnp.float32) * psi).astype(o_ref.dtype)


# ---------------------------------------------------------------------------
# Wrapper
# ---------------------------------------------------------------------------
def _round_up(a, b):
    return -(-a // b) * b


def _choose_lane_tile(hw, bytes_per_lane, budget=8 << 20):
    """Largest lane tile (multiple of 128, <=2048) whose double-buffered
    streams plus (F_int, TL) f32 temporaries stay within `budget` bytes."""
    cap = max(128, (budget // max(bytes_per_lane, 1)) // 128 * 128)
    return int(min(2048, _round_up(hw, 128), cap))


def attention_block(g_nchw, x_nchw, params):
    N, Cg, H, W = g_nchw.shape
    N2, Cx, H2, W2 = x_nchw.shape
    assert (N, H, W) == (N2, H2, W2)
    f32 = jnp.float32

    # bf16 activations go straight to the MXU (v5e/v6e/v7x fast path);
    # anything else stays in f32.
    g_mm = jnp.bfloat16 if g_nchw.dtype == jnp.bfloat16 else f32
    x_mm = jnp.bfloat16 if x_nchw.dtype == jnp.bfloat16 else f32

    wg = params["wg"].astype(f32)                   # (F_int, Cg)
    wx = params["wx"].astype(f32)                   # (F_int, Cx)
    wp = params["wp"].astype(f32)                   # (F_int, 1)  psi conv col
    gg, btg = params["gg"].astype(f32), params["btg"].astype(f32)   # (F_int, 1)
    gx, btx = params["gx"].astype(f32), params["btx"].astype(f32)   # (F_int, 1)
    gp, btp = params["gp"].astype(f32), params["btp"].astype(f32)   # (1, 1)
    F_int = wg.shape[0]

    HW = H * W
    dbytes = max(jnp.dtype(g_nchw.dtype).itemsize,
                 jnp.dtype(x_nchw.dtype).itemsize)
    # double-buffered g/x/out/q streams + 3x (F_int, TL) f32 temporaries
    bytes_per_lane = 2 * dbytes * (Cg + 2 * Cx) + 2 * 4 * 2 + 4 * 3 * F_int
    TL = _choose_lane_tile(HW, bytes_per_lane)
    grid = (N, pl.cdiv(HW, TL))
    need_mask = (HW % TL) != 0

    # NCHW -> (N, C, H*W): pure reshape, no transpose, no padding copies.
    g3 = g_nchw.reshape(N, Cg, HW)
    x3 = x_nchw.reshape(N, Cx, HW)

    def data_spec(c):
        return pl.BlockSpec((None, c, TL), lambda n, j: (n, 0, j))

    def const_spec(shape):
        return pl.BlockSpec(shape, lambda n, j: (0,) * len(shape))

    def acc_spec(c):
        # per-batch resident accumulator: varies with the parallel N axis,
        # constant along the arbitrary (reduction) HW axis.
        return pl.BlockSpec((None, c, 1), lambda n, j: (n, 0, 0))

    reduce_params = pltpu.CompilerParams(
        dimension_semantics=("parallel", "arbitrary"),
        vmem_limit_bytes=32 * 1024 * 1024)
    gate_params = pltpu.CompilerParams(
        dimension_semantics=("parallel", "parallel"),
        vmem_limit_bytes=32 * 1024 * 1024)

    stat = jax.ShapeDtypeStruct((N, F_int, 1), f32)
    scal = jax.ShapeDtypeStruct((N, 1, 1), f32)

    # ---- pass 1: batch statistics of the two projections --------------------
    sg1, sg2, sx1, sx2 = pl.pallas_call(
        functools.partial(_stats_kernel, HW, TL, need_mask),
        grid=grid,
        in_specs=[data_spec(Cg), data_spec(Cx),
                  const_spec((F_int, Cg)), const_spec((F_int, Cx))],
        out_specs=[acc_spec(F_int)] * 4,
        out_shape=[stat] * 4,
        compiler_params=reduce_params,
    )(g3, x3, wg.astype(g_mm), wx.astype(x_mm))

    # ---- host-side fold (channel-sized math, negligible) --------------------
    # Training-mode BN uses biased batch stats; conv biases shift both the
    # activation and its batch mean, so they cancel exactly and never enter
    # the kernels.
    count = jnp.float32(N * HW)
    sg1 = jnp.sum(sg1, axis=0)
    sg2 = jnp.sum(sg2, axis=0)
    sx1 = jnp.sum(sx1, axis=0)
    sx2 = jnp.sum(sx2, axis=0)
    mg = sg1 / count
    vg = jnp.maximum(sg2 / count - mg * mg, 0.0)
    scale_g = gg * jax.lax.rsqrt(vg + EPS)
    mx = sx1 / count
    vx = jnp.maximum(sx2 / count - mx * mx, 0.0)
    scale_x = gx * jax.lax.rsqrt(vx + EPS)

    wfg = wg * scale_g                             # BN folded into projections
    wfx = wx * scale_x
    bf = (btg - mg * scale_g) + (btx - mx * scale_x)          # (F_int, 1)

    # ---- pass 2: psi logit plane + its batch statistics ----------------------
    q_plane, q1, q2 = pl.pallas_call(
        functools.partial(_psi_stats_kernel, HW, TL, need_mask),
        grid=grid,
        in_specs=[data_spec(Cg), data_spec(Cx),
                  const_spec((F_int, Cg)), const_spec((F_int, Cx)),
                  const_spec((F_int, 1)), const_spec((F_int, 1))],
        out_specs=[data_spec(1), acc_spec(1), acc_spec(1)],
        out_shape=[jax.ShapeDtypeStruct((N, 1, HW), f32), scal, scal],
        compiler_params=reduce_params,
    )(g3, x3, wfg.astype(g_mm), wfx.astype(x_mm), bf, wp)

    q_sum = jnp.sum(q1, axis=0).reshape(1, 1)
    q_sq = jnp.sum(q2, axis=0).reshape(1, 1)
    mq = q_sum / count
    vq = jnp.maximum(q_sq / count - mq * mq, 0.0)
    s_p = gp * jax.lax.rsqrt(vq + EPS)             # (1, 1) folded psi BN scale
    bp2 = btp - mq * s_p                           # (1, 1) folded psi BN shift

    # ---- pass 3: pure streaming gate (no matmuls, no g read) -----------------
    out3 = pl.pallas_call(
        _gate_kernel,
        grid=grid,
        in_specs=[data_spec(Cx), data_spec(1),
                  const_spec((1, 1)), const_spec((1, 1))],
        out_specs=data_spec(Cx),
        out_shape=jax.ShapeDtypeStruct((N, Cx, HW), x_nchw.dtype),
        compiler_params=gate_params,
    )(x3, q_plane, s_p, bp2)

    return out3.reshape(N, Cx, H, W)


# ---------------------------------------------------------------------------
# Params + pure-JAX reference (loose correctness check)
# ---------------------------------------------------------------------------
def init_params(key, F_g, F_l, F_int):
    ks = jax.random.split(key, 6)
    f32 = jnp.float32
    return {
        # 1x1 conv weights stored as (out_ch, in_ch); psi weight as a column.
        "wg": jax.random.normal(ks[0], (F_int, F_g), f32) * 0.1,
        "bg": jax.random.normal(ks[1], (F_int, 1), f32) * 0.1,
        "wx": jax.random.normal(ks[2], (F_int, F_l), f32) * 0.1,
        "bx": jax.random.normal(ks[3], (F_int, 1), f32) * 0.1,
        "wp": jax.random.normal(ks[4], (F_int, 1), f32) * 0.1,
        "bp": jax.random.normal(ks[5], (1, 1), f32) * 0.1,
        # BatchNorm affine params (PyTorch default init: weight=1, bias=0)
        "gg": jnp.ones((F_int, 1), f32), "btg": jnp.zeros((F_int, 1), f32),
        "gx": jnp.ones((F_int, 1), f32), "btx": jnp.zeros((F_int, 1), f32),
        "gp": jnp.ones((1, 1), f32),     "btp": jnp.zeros((1, 1), f32),
    }


def _reference(g_nchw, x_nchw, params):
    N, Cg, H, W = g_nchw.shape
    _, Cx, _, _ = x_nchw.shape
    M = N * H * W
    g2 = jnp.transpose(g_nchw, (0, 2, 3, 1)).reshape(M, Cg)
    x2 = jnp.transpose(x_nchw, (0, 2, 3, 1)).reshape(M, Cx)

    def bn(y, gamma, beta):
        mu = jnp.mean(y, axis=0, keepdims=True)
        var = jnp.mean((y - mu) ** 2, axis=0, keepdims=True)
        return (y - mu) / jnp.sqrt(var + EPS) * gamma + beta

    g1 = bn(g2 @ params["wg"].T + params["bg"].T, params["gg"].T, params["btg"].T)
    x1 = bn(x2 @ params["wx"].T + params["bx"].T, params["gx"].T, params["btx"].T)
    a = jnp.maximum(g1 + x1, 0.0)
    p = bn(a @ params["wp"] + params["bp"], params["gp"], params["btp"])
    psi = jax.nn.sigmoid(p)
    out = (x2 * psi).reshape(N, H, W, Cx)
    return jnp.transpose(out, (0, 3, 1, 2))


if __name__ == "__main__":
    key = jax.random.PRNGKey(0)
    k_g, k_x, k_p = jax.random.split(key, 3)

    N, F_g, F_l, F_int, H, W = 2, 4, 4, 8, 16, 16
    g = jax.random.normal(k_g, (N, F_g, H, W), jnp.float32)
    x = jax.random.normal(k_x, (N, F_l, H, W), jnp.float32)
    params = init_params(k_p, F_g, F_l, F_int)

    out = jax.jit(attention_block)(g, x, params)
    jax.block_until_ready(out)
    assert out.shape == (N, F_l, H, W), out.shape
    assert bool(jnp.all(jnp.isfinite(out)))

    # Loose tolerance: allows for MXU default-precision differences between the
    # kernel matmuls and the XLA reference while still catching real bugs.
    ref = _reference(g, x, params)
    err = float(jnp.max(jnp.abs(out - ref)))
    assert err < 5e-2, f"max abs error vs reference: {err}"

    print("KERNEL_OK")
</pallas_src>

<mosaic_0001>
module attributes {stable_mosaic.version = 11 : i64} {
  func.func @_stats_kernel(%arg0: i32, %arg1: i32, %arg2: memref<1x4x256xf32, #tpu.memory_space<vmem>>, %arg3: memref<1x4x256xf32, #tpu.memory_space<vmem>>, %arg4: memref<8x4xf32, #tpu.memory_space<vmem>>, %arg5: memref<8x4xf32, #tpu.memory_space<vmem>>, %arg6: memref<1x8x1xf32, #tpu.memory_space<vmem>>, %arg7: memref<1x8x1xf32, #tpu.memory_space<vmem>>, %arg8: memref<1x8x1xf32, #tpu.memory_space<vmem>>, %arg9: memref<1x8x1xf32, #tpu.memory_space<vmem>>) attributes {dimension_semantics = [#tpu.dimension_semantics<parallel>, #tpu.dimension_semantics<arbitrary>], iteration_bounds = array<i64: 2, 1>, scalar_prefetch = 0 : i64, scratch_operands = 0 : i64, tpu.core_type = #tpu.core_type<tc>, window_params = [{transform_indices = @transform_0, window_bounds = array<i64: 1, 4, 256>}, {transform_indices = @transform_1, window_bounds = array<i64: 1, 4, 256>}, {pipeline_mode = #tpu.pipeline_mode<synchronous>, transform_indices = @transform_2, window_bounds = array<i64: 8, 4>}, {pipeline_mode = #tpu.pipeline_mode<synchronous>, transform_indices = @transform_3, window_bounds = array<i64: 8, 4>}, {transform_indices = @transform_4, window_bounds = array<i64: 1, 8, 1>}, {transform_indices = @transform_5, window_bounds = array<i64: 1, 8, 1>}, {transform_indices = @transform_6, window_bounds = array<i64: 1, 8, 1>}, {transform_indices = @transform_7, window_bounds = array<i64: 1, 8, 1>}]} {
    %c0_i32 = arith.constant 0 : i32
    %0 = arith.cmpi eq, %arg1, %c0_i32 : i32
    %1 = arith.extui %0 : i1 to i32
    %c0_i32_0 = arith.constant 0 : i32
    %2 = arith.cmpi ne, %1, %c0_i32_0 : i32
    scf.if %2 {
      %cst_39 = arith.constant 0.000000e+00 : f32
      %45 = vector.broadcast %cst_39 : f32 to vector<8x1xf32>
      %c0_40 = arith.constant 0 : index
      %c0_41 = arith.constant 0 : index
      %c0_42 = arith.constant 0 : index
      %46 = vector.load %arg6[%c0_40, %c0_41, %c0_42] : memref<1x8x1xf32, #tpu.memory_space<vmem>>, vector<1x8x1xf32>
      %47 = vector.shape_cast %46 : vector<1x8x1xf32> to vector<8x1xf32>
      %48 = vector.shape_cast %45 : vector<8x1xf32> to vector<1x8x1xf32>
      tpu.vector_store %arg6[%c0_40, %c0_41, %c0_42], %48 {strides = array<i32>} : memref<1x8x1xf32, #tpu.memory_space<vmem>>, vector<1x8x1xf32>,
      %cst_43 = arith.constant 0.000000e+00 : f32
      %49 = vector.broadcast %cst_43 : f32 to vector<8x1xf32>
      %c0_44 = arith.constant 0 : index
      %c0_45 = arith.constant 0 : index
      %c0_46 = arith.constant 0 : index
      %50 = vector.load %arg7[%c0_44, %c0_45, %c0_46] : memref<1x8x1xf32, #tpu.memory_space<vmem>>, vector<1x8x1xf32>
      %51 = vector.shape_cast %50 : vector<1x8x1xf32> to vector<8x1xf32>
      %52 = vector.shape_cast %49 : vector<8x1xf32> to vector<1x8x1xf32>
      tpu.vector_store %arg7[%c0_44, %c0_45, %c0_46], %52 {strides = array<i32>} : memref<1x8x1xf32, #tpu.memory_space<vmem>>, vector<1x8x1xf32>,
      %cst_47 = arith.constant 0.000000e+00 : f32
      %53 = vector.broadcast %cst_47 : f32 to vector<8x1xf32>
      %c0_48 = arith.constant 0 : index
      %c0_49 = arith.constant 0 : index
      %c0_50 = arith.constant 0 : index
      %54 = vector.load %arg8[%c0_48, %c0_49, %c0_50] : memref<1x8x1xf32, #tpu.memory_space<vmem>>, vector<1x8x1xf32>
      %55 = vector.shape_cast %54 : vector<1x8x1xf32> to vector<8x1xf32>
      %56 = vector.shape_cast %53 : vector<8x1xf32> to vector<1x8x1xf32>
      tpu.vector_store %arg8[%c0_48, %c0_49, %c0_50], %56 {strides = array<i32>} : memref<1x8x1xf32, #tpu.memory_space<vmem>>, vector<1x8x1xf32>,
      %cst_51 = arith.constant 0.000000e+00 : f32
      %57 = vector.broadcast %cst_51 : f32 to vector<8x1xf32>
      %c0_52 = arith.constant 0 : index
      %c0_53 = arith.constant 0 : index
      %c0_54 = arith.constant 0 : index
      %58 = vector.load %arg9[%c0_52, %c0_53, %c0_54] : memref<1x8x1xf32, #tpu.memory_space<vmem>>, vector<1x8x1xf32>
      %59 = vector.shape_cast %58 : vector<1x8x1xf32> to vector<8x1xf32>
      %60 = vector.shape_cast %57 : vector<8x1xf32> to vector<1x8x1xf32>
      tpu.vector_store %arg9[%c0_52, %c0_53, %c0_54], %60 {strides = array<i32>} : memref<1x8x1xf32, #tpu.memory_space<vmem>>, vector<1x8x1xf32>,
    } else {
    }
    %c0 = arith.constant 0 : index
    %c0_1 = arith.constant 0 : index
    %3 = vector.load %arg4[%c0, %c0_1] : memref<8x4xf32, #tpu.memory_space<vmem>>, vector<8x4xf32>
    %c0_2 = arith.constant 0 : index
    %c0_3 = arith.constant 0 : index
    %c0_4 = arith.constant 0 : index
    %4 = vector.load %arg2[%c0_2, %c0_3, %c0_4] : memref<1x4x256xf32, #tpu.memory_space<vmem>>, vector<1x4x256xf32>
    %5 = vector.shape_cast %4 : vector<1x4x256xf32> to vector<4x256xf32>
    %cst = arith.constant dense<0.000000e+00> : vector<8x256xf32>
    %6 = tpu.matmul %3, %5, %cst {dimension_numbers = #tpu.dot_dimension_numbers<[1], [0], [0], [1], [0, 0, 1, 1], [], []>} : vector<8x4xf32>, vector<4x256xf32>, vector<8x256xf32> -> vector<8x256xf32>
    %c0_5 = arith.constant 0 : index
    %c0_6 = arith.constant 0 : index
    %7 = vector.load %arg5[%c0_5, %c0_6] : memref<8x4xf32, #tpu.memory_space<vmem>>, vector<8x4xf32>
    %c0_7 = arith.constant 0 : index
    %c0_8 = arith.constant 0 : index
    %c0_9 = arith.constant 0 : index
    %8 = vector.load %arg3[%c0_7, %c0_8, %c0_9] : memref<1x4x256xf32, #tpu.memory_space<vmem>>, vector<1x4x256xf32>
    %9 = vector.shape_cast %8 : vector<1x4x256xf32> to vector<4x256xf32>
    %cst_10 = arith.constant dense<0.000000e+00> : vector<8x256xf32>
    %10 = tpu.matmul %7, %9, %cst_10 {dimension_numbers = #tpu.dot_dimension_numbers<[1], [0], [0], [1], [0, 0, 1, 1], [], []>} : vector<8x4xf32>, vector<4x256xf32>, vector<8x256xf32> -> vector<8x256xf32>
    %c0_11 = arith.constant 0 : index
    %c0_12 = arith.constant 0 : index
    %c0_13 = arith.constant 0 : index
    %11 = vector.load %arg6[%c0_11, %c0_12, %c0_13] : memref<1x8x1xf32, #tpu.memory_space<vmem>>, vector<1x8x1xf32>
    %12 = vector.shape_cast %11 : vector<1x8x1xf32> to vector<8x1xf32>
    %cst_14 = arith.constant dense<0.000000e+00> : vector<8xf32>
    %13 = vector.multi_reduction <add>, %6, %cst_14 [1] : vector<8x256xf32> to vector<8xf32>
    %14 = vector.shape_cast %13 : vector<8xf32> to vector<8x1xf32>
    %15 = arith.addf %12, %14 : vector<8x1xf32>
    %c0_15 = arith.constant 0 : index
    %c0_16 = arith.constant 0 : index
    %c0_17 = arith.constant 0 : index
    %16 = vector.load %arg6[%c0_15, %c0_16, %c0_17] : memref<1x8x1xf32, #tpu.memory_space<vmem>>, vector<1x8x1xf32>
    %17 = vector.shape_cast %16 : vector<1x8x1xf32> to vector<8x1xf32>
    %18 = vector.shape_cast %15 : vector<8x1xf32> to vector<1x8x1xf32>
    tpu.vector_store %arg6[%c0_15, %c0_16, %c0_17], %18 {strides = array<i32>} : memref<1x8x1xf32, #tpu.memory_space<vmem>>, vector<1x8x1xf32>,
    %c0_18 = arith.constant 0 : index
    %c0_19 = arith.constant 0 : index
    %c0_20 = arith.constant 0 : index
    %19 = vector.load %arg7[%c0_18, %c0_19, %c0_20] : memref<1x8x1xf32, #tpu.memory_space<vmem>>, vector<1x8x1xf32>
    %20 = vector.shape_cast %19 : vector<1x8x1xf32> to vector<8x1xf32>
    %21 = arith.mulf %6, %6 : vector<8x256xf32>
    %cst_21 = arith.constant dense<0.000000e+00> : vector<8xf32>
    %22 = vector.multi_reduction <add>, %21, %cst_21 [1] : vector<8x256xf32> to vector<8xf32>
    %23 = vector.shape_cast %22 : vector<8xf32> to vector<8x1xf32>
    %24 = arith.addf %20, %23 : vector<8x1xf32>
    %c0_22 = arith.constant 0 : index
    %c0_23 = arith.constant 0 : index
    %c0_24 = arith.constant 0 : index
    %25 = vector.load %arg7[%c0_22, %c0_23, %c0_24] : memref<1x8x1xf32, #tpu.memory_space<vmem>>, vector<1x8x1xf32>
    %26 = vector.shape_cast %25 : vector<1x8x1xf32> to vector<8x1xf32>
    %27 = vector.shape_cast %24 : vector<8x1xf32> to vector<1x8x1xf32>
    tpu.vector_store %arg7[%c0_22, %c0_23, %c0_24], %27 {strides = array<i32>} : memref<1x8x1xf32, #tpu.memory_space<vmem>>, vector<1x8x1xf32>,
    %c0_25 = arith.constant 0 : index
    %c0_26 = arith.constant 0 : index
    %c0_27 = arith.constant 0 : index
    %28 = vector.load %arg8[%c0_25, %c0_26, %c0_27] : memref<1x8x1xf32, #tpu.memory_space<vmem>>, vector<1x8x1xf32>
    %29 = vector.shape_cast %28 : vector<1x8x1xf32> to vector<8x1xf32>
    %cst_28 = arith.constant dense<0.000000e+00> : vector<8xf32>
    %30 = vector.multi_reduction <add>, %10, %cst_28 [1] : vector<8x256xf32> to vector<8xf32>
    %31 = vector.shape_cast %30 : vector<8xf32> to vector<8x1xf32>
    %32 = arith.addf %29, %31 : vector<8x1xf32>
    %c0_29 = arith.constant 0 : index
    %c0_30 = arith.constant 0 : index
    %c0_31 = arith.constant 0 : index
    %33 = vector.load %arg8[%c0_29, %c0_30, %c0_31] : memref<1x8x1xf32, #tpu.memory_space<vmem>>, vector<1x8x1xf32>
    %34 = vector.shape_cast %33 : vector<1x8x1xf32> to vector<8x1xf32>
    %35 = vector.shape_cast %32 : vector<8x1xf32> to vector<1x8x1xf32>
    tpu.vector_store %arg8[%c0_29, %c0_30, %c0_31], %35 {strides = array<i32>} : memref<1x8x1xf32, #tpu.memory_space<vmem>>, vector<1x8x1xf32>,
    %c0_32 = arith.constant 0 : index
    %c0_33 = arith.constant 0 : index
    %c0_34 = arith.constant 0 : index
    %36 = vector.load %arg9[%c0_32, %c0_33, %c0_34] : memref<1x8x1xf32, #tpu.memory_space<vmem>>, vector<1x8x1xf32>
    %37 = vector.shape_cast %36 : vector<1x8x1xf32> to vector<8x1xf32>
    %38 = arith.mulf %10, %10 : vector<8x256xf32>
    %cst_35 = arith.constant dense<0.000000e+00> : vector<8xf32>
    %39 = vector.multi_reduction <add>, %38, %cst_35 [1] : vector<8x256xf32> to vector<8xf32>
    %40 = vector.shape_cast %39 : vector<8xf32> to vector<8x1xf32>
    %41 = arith.addf %37, %40 : vector<8x1xf32>
    %c0_36 = arith.constant 0 : index
    %c0_37 = arith.constant 0 : index
    %c0_38 = arith.constant 0 : index
    %42 = vector.load %arg9[%c0_36, %c0_37, %c0_38] : memref<1x8x1xf32, #tpu.memory_space<vmem>>, vector<1x8x1xf32>
    %43 = vector.shape_cast %42 : vector<1x8x1xf32> to vector<8x1xf32>
    %44 = vector.shape_cast %41 : vector<8x1xf32> to vector<1x8x1xf32>
    tpu.vector_store %arg9[%c0_36, %c0_37, %c0_38], %44 {strides = array<i32>} : memref<1x8x1xf32, #tpu.memory_space<vmem>>, vector<1x8x1xf32>,
    return
  }
  func.func @transform_0(%arg0: i32, %arg1: i32) -> (i32, i32, i32) {
    %c0_i32 = arith.constant 0 : i32
    %c0_i32_0 = arith.constant 0 : i32
    return %arg0, %c0_i32, %arg1 : i32, i32, i32
  }
  func.func @transform_1(%arg0: i32, %arg1: i32) -> (i32, i32, i32) {
    %c0_i32 = arith.constant 0 : i32
    %c0_i32_0 = arith.constant 0 : i32
    return %arg0, %c0_i32, %arg1 : i32, i32, i32
  }
  func.func @transform_2(%arg0: i32, %arg1: i32) -> (i32, i32) {
    %c0_i32 = arith.constant 0 : i32
    %c0_i32_0 = arith.constant 0 : i32
    %c0_i32_1 = arith.constant 0 : i32
    return %c0_i32, %c0_i32_0 : i32, i32
  }
  func.func @transform_3(%arg0: i32, %arg1: i32) -> (i32, i32) {
    %c0_i32 = arith.constant 0 : i32
    %c0_i32_0 = arith.constant 0 : i32
    %c0_i32_1 = arith.constant 0 : i32
    return %c0_i32, %c0_i32_0 : i32, i32
  }
  func.func @transform_4(%arg0: i32, %arg1: i32) -> (i32, i32, i32) {
    %c0_i32 = arith.constant 0 : i32
    %c0_i32_0 = arith.constant 0 : i32
    %c0_i32_1 = arith.constant 0 : i32
    return %arg0, %c0_i32, %c0_i32_0 : i32, i32, i32
  }
  func.func @transform_5(%arg0: i32, %arg1: i32) -> (i32, i32, i32) {
    %c0_i32 = arith.constant 0 : i32
    %c0_i32_0 = arith.constant 0 : i32
    %c0_i32_1 = arith.constant 0 : i32
    return %arg0, %c0_i32, %c0_i32_0 : i32, i32, i32
  }
  func.func @transform_6(%arg0: i32, %arg1: i32) -> (i32, i32, i32) {
    %c0_i32 = arith.constant 0 : i32
    %c0_i32_0 = arith.constant 0 : i32
    %c0_i32_1 = arith.constant 0 : i32
    return %arg0, %c0_i32, %c0_i32_0 : i32, i32, i32
  }
  func.func @transform_7(%arg0: i32, %arg1: i32) -> (i32, i32, i32) {
    %c0_i32 = arith.constant 0 : i32
    %c0_i32_0 = arith.constant 0 : i32
    %c0_i32_1 = arith.constant 0 : i32
    return %arg0, %c0_i32, %c0_i32_0 : i32, i32, i32
  }
}

module attributes {stable_mosaic.version = 11 : i64} {
  func.func @_psi_stats_kernel(%arg0: i32, %arg1: i32, %arg2: memref<1x4x256xf32, #tpu.memory_space<vmem>>, %arg3: memref<1x4x256xf32, #tpu.memory_space<vmem>>, %arg4: memref<8x4xf32, #tpu.memory_space<vmem>>, %arg5: memref<8x4xf32, #tpu.memory_space<vmem>>, %arg6: memref<8x1xf32, #tpu.memory_space<vmem>>, %arg7: memref<8x1xf32, #tpu.memory_space<vmem>>, %arg8: memref<1x1x256xf32, #tpu.memory_space<vmem>>, %arg9: memref<1x1x1xf32, #tpu.memory_space<vmem>>, %arg10: memref<1x1x1xf32, #tpu.memory_space<vmem>>) attributes {dimension_semantics = [#tpu.dimension_semantics<parallel>, #tpu.dimension_semantics<arbitrary>], iteration_bounds = array<i64: 2, 1>, scalar_prefetch = 0 : i64, scratch_operands = 0 : i64, tpu.core_type = #tpu.core_type<tc>, window_params = [{transform_indices = @transform_0, window_bounds = array<i64: 1, 4, 256>}, {transform_indices = @transform_1, window_bounds = array<i64: 1, 4, 256>}, {pipeline_mode = #tpu.pipeline_mode<synchronous>, transform_indices = @transform_2, window_bounds = array<i64: 8, 4>}, {pipeline_mode = #tpu.pipeline_mode<synchronous>, transform_indices = @transform_3, window_bounds = array<i64: 8, 4>}, {pipeline_mode = #tpu.pipeline_mode<synchronous>, transform_indices = @transform_4, window_bounds = array<i64: 8, 1>}, {pipeline_mode = #tpu.pipeline_mode<synchronous>, transform_indices = @transform_5, window_bounds = array<i64: 8, 1>}, {transform_indices = @transform_6, window_bounds = array<i64: 1, 1, 256>}, {transform_indices = @transform_7, window_bounds = array<i64: 1, 1, 1>}, {transform_indices = @transform_8, window_bounds = array<i64: 1, 1, 1>}]} {
    %c0_i32 = arith.constant 0 : i32
    %0 = arith.cmpi eq, %arg1, %c0_i32 : i32
    %1 = arith.extui %0 : i1 to i32
    %c0_i32_0 = arith.constant 0 : i32
    %2 = arith.cmpi ne, %1, %c0_i32_0 : i32
    scf.if %2 {
      %cst_34 = arith.constant 0.000000e+00 : f32
      %42 = vector.broadcast %cst_34 : f32 to vector<1x1xf32>
      %c0_35 = arith.constant 0 : index
      %c0_36 = arith.constant 0 : index
      %c0_37 = arith.constant 0 : index
      %43 = vector.load %arg9[%c0_35, %c0_36, %c0_37] : memref<1x1x1xf32, #tpu.memory_space<vmem>>, vector<1x1x1xf32>
      %44 = vector.shape_cast %43 : vector<1x1x1xf32> to vector<1x1xf32>
      %45 = vector.shape_cast %42 : vector<1x1xf32> to vector<1x1x1xf32>
      tpu.vector_store %arg9[%c0_35, %c0_36, %c0_37], %45 {strides = array<i32>} : memref<1x1x1xf32, #tpu.memory_space<vmem>>, vector<1x1x1xf32>,
      %cst_38 = arith.constant 0.000000e+00 : f32
      %46 = vector.broadcast %cst_38 : f32 to vector<1x1xf32>
      %c0_39 = arith.constant 0 : index
      %c0_40 = arith.constant 0 : index
      %c0_41 = arith.constant 0 : index
      %47 = vector.load %arg10[%c0_39, %c0_40, %c0_41] : memref<1x1x1xf32, #tpu.memory_space<vmem>>, vector<1x1x1xf32>
      %48 = vector.shape_cast %47 : vector<1x1x1xf32> to vector<1x1xf32>
      %49 = vector.shape_cast %46 : vector<1x1xf32> to vector<1x1x1xf32>
      tpu.vector_store %arg10[%c0_39, %c0_40, %c0_41], %49 {strides = array<i32>} : memref<1x1x1xf32, #tpu.memory_space<vmem>>, vector<1x1x1xf32>,
    } else {
    }
    %c0 = arith.constant 0 : index
    %c0_1 = arith.constant 0 : index
    %3 = vector.load %arg4[%c0, %c0_1] : memref<8x4xf32, #tpu.memory_space<vmem>>, vector<8x4xf32>
    %c0_2 = arith.constant 0 : index
    %c0_3 = arith.constant 0 : index
    %c0_4 = arith.constant 0 : index
    %4 = vector.load %arg2[%c0_2, %c0_3, %c0_4] : memref<1x4x256xf32, #tpu.memory_space<vmem>>, vector<1x4x256xf32>
    %5 = vector.shape_cast %4 : vector<1x4x256xf32> to vector<4x256xf32>
    %cst = arith.constant dense<0.000000e+00> : vector<8x256xf32>
    %6 = tpu.matmul %3, %5, %cst {dimension_numbers = #tpu.dot_dimension_numbers<[1], [0], [0], [1], [0, 0, 1, 1], [], []>} : vector<8x4xf32>, vector<4x256xf32>, vector<8x256xf32> -> vector<8x256xf32>
    %c0_5 = arith.constant 0 : index
    %c0_6 = arith.constant 0 : index
    %7 = vector.load %arg5[%c0_5, %c0_6] : memref<8x4xf32, #tpu.memory_space<vmem>>, vector<8x4xf32>
    %c0_7 = arith.constant 0 : index
    %c0_8 = arith.constant 0 : index
    %c0_9 = arith.constant 0 : index
    %8 = vector.load %arg3[%c0_7, %c0_8, %c0_9] : memref<1x4x256xf32, #tpu.memory_space<vmem>>, vector<1x4x256xf32>
    %9 = vector.shape_cast %8 : vector<1x4x256xf32> to vector<4x256xf32>
    %cst_10 = arith.constant dense<0.000000e+00> : vector<8x256xf32>
    %10 = tpu.matmul %7, %9, %cst_10 {dimension_numbers = #tpu.dot_dimension_numbers<[1], [0], [0], [1], [0, 0, 1, 1], [], []>} : vector<8x4xf32>, vector<4x256xf32>, vector<8x256xf32> -> vector<8x256xf32>
    %11 = arith.addf %6, %10 : vector<8x256xf32>
    %c0_11 = arith.constant 0 : index
    %c0_12 = arith.constant 0 : index
    %12 = vector.load %arg6[%c0_11, %c0_12] : memref<8x1xf32, #tpu.memory_space<vmem>>, vector<8x1xf32>
    %13 = vector.broadcast %12 : vector<8x1xf32> to vector<8x256xf32>
    %14 = arith.addf %11, %13 : vector<8x256xf32>
    %cst_13 = arith.constant 0.000000e+00 : f32
    %15 = vector.broadcast %cst_13 : f32 to vector<8x256xf32>
    %16 = arith.maximumf %14, %15 : vector<8x256xf32>
    %c0_14 = arith.constant 0 : index
    %c0_15 = arith.constant 0 : index
    %17 = vector.load %arg7[%c0_14, %c0_15] : memref<8x1xf32, #tpu.memory_space<vmem>>, vector<8x1xf32>
    %18 = vector.broadcast %17 : vector<8x1xf32> to vector<8x256xf32>
    %19 = arith.mulf %16, %18 : vector<8x256xf32>
    %cst_16 = arith.constant dense<0.000000e+00> : vector<256xf32>
    %20 = vector.multi_reduction <add>, %19, %cst_16 [0] : vector<8x256xf32> to vector<256xf32>
    %21 = vector.shape_cast %20 : vector<256xf32> to vector<1x256xf32>
    %c0_17 = arith.constant 0 : index
    %c0_18 = arith.constant 0 : index
    %c0_19 = arith.constant 0 : index
    %22 = vector.load %arg8[%c0_17, %c0_18, %c0_19] : memref<1x1x256xf32, #tpu.memory_space<vmem>>, vector<1x1x256xf32>
    %23 = vector.shape_cast %22 : vector<1x1x256xf32> to vector<1x256xf32>
    %24 = vector.shape_cast %21 : vector<1x256xf32> to vector<1x1x256xf32>
    tpu.vector_store %arg8[%c0_17, %c0_18, %c0_19], %24 {strides = array<i32>} : memref<1x1x256xf32, #tpu.memory_space<vmem>>, vector<1x1x256xf32>,
    %c0_20 = arith.constant 0 : index
    %c0_21 = arith.constant 0 : index
    %c0_22 = arith.constant 0 : index
    %25 = vector.load %arg9[%c0_20, %c0_21, %c0_22] : memref<1x1x1xf32, #tpu.memory_space<vmem>>, vector<1x1x1xf32>
    %26 = vector.shape_cast %25 : vector<1x1x1xf32> to vector<1x1xf32>
    %cst_23 = arith.constant dense<0.000000e+00> : vector<1xf32>
    %27 = vector.multi_reduction <add>, %21, %cst_23 [1] : vector<1x256xf32> to vector<1xf32>
    %28 = vector.shape_cast %27 : vector<1xf32> to vector<1x1xf32>
    %29 = arith.addf %26, %28 : vector<1x1xf32>
    %c0_24 = arith.constant 0 : index
    %c0_25 = arith.constant 0 : index
    %c0_26 = arith.constant 0 : index
    %30 = vector.load %arg9[%c0_24, %c0_25, %c0_26] : memref<1x1x1xf32, #tpu.memory_space<vmem>>, vector<1x1x1xf32>
    %31 = vector.shape_cast %30 : vector<1x1x1xf32> to vector<1x1xf32>
    %32 = vector.shape_cast %29 : vector<1x1xf32> to vector<1x1x1xf32>
    tpu.vector_store %arg9[%c0_24, %c0_25, %c0_26], %32 {strides = array<i32>} : memref<1x1x1xf32, #tpu.memory_space<vmem>>, vector<1x1x1xf32>,
    %c0_27 = arith.constant 0 : index
    %c0_28 = arith.constant 0 : index
    %c0_29 = arith.constant 0 : index
    %33 = vector.load %arg10[%c0_27, %c0_28, %c0_29] : memref<1x1x1xf32, #tpu.memory_space<vmem>>, vector<1x1x1xf32>
    %34 = vector.shape_cast %33 : vector<1x1x1xf32> to vector<1x1xf32>
    %35 = arith.mulf %21, %21 : vector<1x256xf32>
    %cst_30 = arith.constant dense<0.000000e+00> : vector<1xf32>
    %36 = vector.multi_reduction <add>, %35, %cst_30 [1] : vector<1x256xf32> to vector<1xf32>
    %37 = vector.shape_cast %36 : vector<1xf32> to vector<1x1xf32>
    %38 = arith.addf %34, %37 : vector<1x1xf32>
    %c0_31 = arith.constant 0 : index
    %c0_32 = arith.constant 0 : index
    %c0_33 = arith.constant 0 : index
    %39 = vector.load %arg10[%c0_31, %c0_32, %c0_33] : memref<1x1x1xf32, #tpu.memory_space<vmem>>, vector<1x1x1xf32>
    %40 = vector.shape_cast %39 : vector<1x1x1xf32> to vector<1x1xf32>
    %41 = vector.shape_cast %38 : vector<1x1xf32> to vector<1x1x1xf32>
    tpu.vector_store %arg10[%c0_31, %c0_32, %c0_33], %41 {strides = array<i32>} : memref<1x1x1xf32, #tpu.memory_space<vmem>>, vector<1x1x1xf32>,
    return
  }
  func.func @transform_0(%arg0: i32, %arg1: i32) -> (i32, i32, i32) {
    %c0_i32 = arith.constant 0 : i32
    %c0_i32_0 = arith.constant 0 : i32
    return %arg0, %c0_i32, %arg1 : i32, i32, i32
  }
  func.func @transform_1(%arg0: i32, %arg1: i32) -> (i32, i32, i32) {
    %c0_i32 = arith.constant 0 : i32
    %c0_i32_0 = arith.constant 0 : i32
    return %arg0, %c0_i32, %arg1 : i32, i32, i32
  }
  func.func @transform_2(%arg0: i32, %arg1: i32) -> (i32, i32) {
    %c0_i32 = arith.constant 0 : i32
    %c0_i32_0 = arith.constant 0 : i32
    %c0_i32_1 = arith.constant 0 : i32
    return %c0_i32, %c0_i32_0 : i32, i32
  }
  func.func @transform_3(%arg0: i32, %arg1: i32) -> (i32, i32) {
    %c0_i32 = arith.constant 0 : i32
    %c0_i32_0 = arith.constant 0 : i32
    %c0_i32_1 = arith.constant 0 : i32
    return %c0_i32, %c0_i32_0 : i32, i32
  }
  func.func @transform_4(%arg0: i32, %arg1: i32) -> (i32, i32) {
    %c0_i32 = arith.constant 0 : i32
    %c0_i32_0 = arith.constant 0 : i32
    %c0_i32_1 = arith.constant 0 : i32
    return %c0_i32, %c0_i32_0 : i32, i32
  }
  func.func @transform_5(%arg0: i32, %arg1: i32) -> (i32, i32) {
    %c0_i32 = arith.constant 0 : i32
    %c0_i32_0 = arith.constant 0 : i32
    %c0_i32_1 = arith.constant 0 : i32
    return %c0_i32, %c0_i32_0 : i32, i32
  }
  func.func @transform_6(%arg0: i32, %arg1: i32) -> (i32, i32, i32) {
    %c0_i32 = arith.constant 0 : i32
    %c0_i32_0 = arith.constant 0 : i32
    return %arg0, %c0_i32, %arg1 : i32, i32, i32
  }
  func.func @transform_7(%arg0: i32, %arg1: i32) -> (i32, i32, i32) {
    %c0_i32 = arith.constant 0 : i32
    %c0_i32_0 = arith.constant 0 : i32
    %c0_i32_1 = arith.constant 0 : i32
    return %arg0, %c0_i32, %c0_i32_0 : i32, i32, i32
  }
  func.func @transform_8(%arg0: i32, %arg1: i32) -> (i32, i32, i32) {
    %c0_i32 = arith.constant 0 : i32
    %c0_i32_0 = arith.constant 0 : i32
    %c0_i32_1 = arith.constant 0 : i32
    return %arg0, %c0_i32, %c0_i32_0 : i32, i32, i32
  }
}

module attributes {stable_mosaic.version = 11 : i64} {
  func.func @_gate_kernel(%arg0: i32, %arg1: i32, %arg2: memref<1x4x256xf32, #tpu.memory_space<vmem>>, %arg3: memref<1x1x256xf32, #tpu.memory_space<vmem>>, %arg4: memref<1x1xf32, #tpu.memory_space<vmem>>, %arg5: memref<1x1xf32, #tpu.memory_space<vmem>>, %arg6: memref<1x4x256xf32, #tpu.memory_space<vmem>>) attributes {dimension_semantics = [#tpu.dimension_semantics<parallel>, #tpu.dimension_semantics<parallel>], iteration_bounds = array<i64: 2, 1>, scalar_prefetch = 0 : i64, scratch_operands = 0 : i64, tpu.core_type = #tpu.core_type<tc>, window_params = [{transform_indices = @transform_0, window_bounds = array<i64: 1, 4, 256>}, {transform_indices = @transform_1, window_bounds = array<i64: 1, 1, 256>}, {pipeline_mode = #tpu.pipeline_mode<synchronous>, transform_indices = @transform_2, window_bounds = array<i64: 1, 1>}, {pipeline_mode = #tpu.pipeline_mode<synchronous>, transform_indices = @transform_3, window_bounds = array<i64: 1, 1>}, {transform_indices = @transform_4, window_bounds = array<i64: 1, 4, 256>}]} {
    %c0 = arith.constant 0 : index
    %c0_0 = arith.constant 0 : index
    %c0_1 = arith.constant 0 : index
    %0 = vector.load %arg3[%c0, %c0_0, %c0_1] : memref<1x1x256xf32, #tpu.memory_space<vmem>>, vector<1x1x256xf32>
    %1 = vector.shape_cast %0 : vector<1x1x256xf32> to vector<1x256xf32>
    %c0_2 = arith.constant 0 : index
    %c0_3 = arith.constant 0 : index
    %2 = vector.load %arg4[%c0_2, %c0_3] : memref<1x1xf32, #tpu.memory_space<vmem>>, vector<1x1xf32>
    %3 = vector.broadcast %2 : vector<1x1xf32> to vector<1x256xf32>
    %4 = arith.mulf %1, %3 : vector<1x256xf32>
    %c0_4 = arith.constant 0 : index
    %c0_5 = arith.constant 0 : index
    %5 = vector.load %arg5[%c0_4, %c0_5] : memref<1x1xf32, #tpu.memory_space<vmem>>, vector<1x1xf32>
    %6 = vector.broadcast %5 : vector<1x1xf32> to vector<1x256xf32>
    %7 = arith.addf %4, %6 : vector<1x256xf32>
    %8 = arith.negf %7 : vector<1x256xf32>
    %9 = math.exp %8 : vector<1x256xf32>
    %cst = arith.constant 1.000000e+00 : f32
    %10 = vector.broadcast %cst : f32 to vector<1x256xf32>
    %11 = arith.addf %10, %9 : vector<1x256xf32>
    %12 = arith.divf %10, %11 : vector<1x256xf32>
    %c0_6 = arith.constant 0 : index
    %c0_7 = arith.constant 0 : index
    %c0_8 = arith.constant 0 : index
    %13 = vector.load %arg2[%c0_6, %c0_7, %c0_8] : memref<1x4x256xf32, #tpu.memory_space<vmem>>, vector<1x4x256xf32>
    %14 = vector.shape_cast %13 : vector<1x4x256xf32> to vector<4x256xf32>
    %15 = vector.broadcast %12 : vector<1x256xf32> to vector<4x256xf32>
    %16 = arith.mulf %14, %15 : vector<4x256xf32>
    %c0_9 = arith.constant 0 : index
    %c0_10 = arith.constant 0 : index
    %c0_11 = arith.constant 0 : index
    %17 = vector.load %arg6[%c0_9, %c0_10, %c0_11] : memref<1x4x256xf32, #tpu.memory_space<vmem>>, vector<1x4x256xf32>
    %18 = vector.shape_cast %17 : vector<1x4x256xf32> to vector<4x256xf32>
    %19 = vector.shape_cast %16 : vector<4x256xf32> to vector<1x4x256xf32>
    tpu.vector_store %arg6[%c0_9, %c0_10, %c0_11], %19 {strides = array<i32>} : memref<1x4x256xf32, #tpu.memory_space<vmem>>, vector<1x4x256xf32>,
    return
  }
  func.func @transform_0(%arg0: i32, %arg1: i32) -> (i32, i32, i32) {
    %c0_i32 = arith.constant 0 : i32
    %c0_i32_0 = arith.constant 0 : i32
    return %arg0, %c0_i32, %arg1 : i32, i32, i32
  }
  func.func @transform_1(%arg0: i32, %arg1: i32) -> (i32, i32, i32) {
    %c0_i32 = arith.constant 0 : i32
    %c0_i32_0 = arith.constant 0 : i32
    return %arg0, %c0_i32, %arg1 : i32, i32, i32
  }
  func.func @transform_2(%arg0: i32, %arg1: i32) -> (i32, i32) {
    %c0_i32 = arith.constant 0 : i32
    %c0_i32_0 = arith.constant 0 : i32
    %c0_i32_1 = arith.constant 0 : i32
    return %c0_i32, %c0_i32_0 : i32, i32
  }
  func.func @transform_3(%arg0: i32, %arg1: i32) -> (i32, i32) {
    %c0_i32 = arith.constant 0 : i32
    %c0_i32_0 = arith.constant 0 : i32
    %c0_i32_1 = arith.constant 0 : i32
    return %c0_i32, %c0_i32_0 : i32, i32
  }
  func.func @transform_4(%arg0: i32, %arg1: i32) -> (i32, i32, i32) {
    %c0_i32 = arith.constant 0 : i32
    %c0_i32_0 = arith.constant 0 : i32
    return %arg0, %c0_i32, %arg1 : i32, i32, i32
  }
}

</mosaic_0001>

<llo_original>
// kernel: attention_block.5
$region0: #{attention_block.5}
  #allocation0 [shape = 'u32[]', space=smem, size = 0x4, offset = 0x4, fixed_abs, tag = 'smem constant byte address 0x4 - core index']
  #allocation1 [shape = 'u32[144,128]{1,0:T(1,128)}', space=vmem, size = 0x12000, scoped, tag = 'internal scratch']
  #allocation2 [shape = 'f32[1,1]{1,0:T(1,128)S(1)}', space=vmem, size = 0x200, scoped, tag = 'scoped memory for attention_block.5']
  #allocation3 [shape = 'f32[1,1]{1,0:T(1,128)S(1)}', space=vmem, size = 0x200, scoped, tag = 'scoped memory for attention_block.5']
  %s0 = inlined_call_operand.vmem [shape: f32[2,4,256], index: 0, kind: input, shape index: {}]
  %s1 = inlined_call_operand.vmem [shape: f32[2,1,256], index: 1, kind: input, shape index: {}]
  %s2 = inlined_call_operand.<no memory space> [shape: f32[1,1], index: 2, kind: input, shape index: {}]
  %s3 = inlined_call_operand.<no memory space> [shape: f32[1,1], index: 3, kind: input, shape index: {}]
  %s4 = inlined_call_operand.vmem [shape: f32[2,4,256], index: 4, kind: output, shape index: {}]
  %s5 = sld [smem:[#allocation0]]
  $region49: #{attention_block.5} parent=0
    _
  %s7 = ssub.s32 1, %s5
  %s8 = scalar_select 0, %s7, %s5
  %v9 = vstv %s2
  %10 = vst [vmem:[#allocation2] sm:$0x1] %v9
  %v11 = vstv %s3
  %12 = vst [vmem:[#allocation3] sm:$0x1] %v11
  loop: start=0, step=1, limit=4
  $region2: #{attention_block.5} parent=0 // loop_pre_header
    _
  $region3: #{attention_block.5} parent=0 // loop_header
    %s14 = sphi 0, %s18
    %p15 = scmp.ge.s32.totalorder %s14, 4
    %s21 = sphi 0, %s33
    %s22 = sphi 0, %s29
    %s23 = sphi 0, %s21
    %s24 = sphi 0, %s22
    %s25 = sphi 0, %s23
    %s26 = sphi 0, %s24
    %s38 = sphi 0, %s40
    %s41 = sphi 0, %s38
    %s42 = sphi 0, %s41
    %s58 = sphi 0, %s42
    %s66 = sphi 0, %s68
    %s69 = sphi 0, %s66
    %s70 = sphi 0, %s69
    %s86 = sphi 0, %s70
    %s90 = sphi 0, %s90
    %s92 = sphi 0, %s90
    %s93 = sphi 0, %s92
    %s107 = sphi 0, %s93
    %s111 = sphi 0, %s111
    %s113 = sphi 0, %s111
    %s114 = sphi 0, %s113
    %s128 = sphi 0, %s114
    %s136 = sphi 0, %s138
    %s139 = sphi 0, %s136
    %s140 = sphi 0, %s139
    %s156 = sphi 0, %s140
  $region4: #{attention_block.5} parent=0 // loop_header_branch
    %17 = sbr.rel (%p15) target = $region8
  $region5: #{attention_block.5} parent=0 // loop_body
    %s19 = ssub.s32 %s14, 1
    %s20 = ssub.s32 %s14, 2
    %s27 = sadd.s32 1, %s22
    %p28 = scmp.ge.s32.totalorder %s27, 1
    %s29 = scalar_select %p28, 0, %s27
    %s30 = sadd.s32 1, %s21
    %s31 = scalar_select %p28, %s30, %s21
    %p32 = scmp.ge.s32.totalorder %s31, 2
    %s33 = scalar_select %p32, 0, %s31
    %s34 = ssub.s32 %s21, %s33
    %s35 = ssub.s32 %s22, %s29
    %s36 = sor.u32 %s34, %s35
    %p37 = scmp.eq.s32.totalorder %s36, 0
    %s39 = sadd.s32 %s38, 1
    %s40 = scalar_select %p37, %s38, %s39
    %p43 = pneg %p37
    %p44 = scmp.eq.s32.totalorder %s14, 1
    %p45 = por %p43, %p44
    %p46 = scmp.ne.s32.totalorder %s38, %s41
    %p47 = scmp.eq.s32.totalorder %s14, 0
    %p48 = por %p46, %p47
    %p49 = scmp.ne.s32.totalorder %s38, %s41
    %p50 = scmp.eq.s32.totalorder %s19, 1
    %p51 = por %p49, %p50
    %p52 = scmp.ne.s32.totalorder %s41, %s42
    %p53 = scmp.eq.s32.totalorder %s19, 0
    %p54 = por %p52, %p53
    %p55 = scmp.ne.s32.totalorder %s41, %s42
    %p56 = scmp.eq.s32.totalorder %s20, 1
    %p57 = por %p55, %p56
    %p59 = scmp.ne.s32.totalorder %s42, %s58
    %p60 = scmp.eq.s32.totalorder %s20, 0
    %p61 = por %p59, %p60
    %s62 = ssub.s32 %s21, %s33
    %s63 = ssub.s32 %s22, %s29
    %s64 = sor.u32 %s62, %s63
    %p65 = scmp.eq.s32.totalorder %s64, 0
    %s67 = sadd.s32 %s66, 1
    %s68 = scalar_select %p65, %s66, %s67
    %p71 = pneg %p65
    %p72 = scmp.eq.s32.totalorder %s14, 1
    %p73 = por %p71, %p72
    %p74 = scmp.ne.s32.totalorder %s66, %s69
    %p75 = scmp.eq.s32.totalorder %s14, 0
    %p76 = por %p74, %p75
    %p77 = scmp.ne.s32.totalorder %s66, %s69
    %p78 = scmp.eq.s32.totalorder %s19, 1
    %p79 = por %p77, %p78
    %p80 = scmp.ne.s32.totalorder %s69, %s70
    %p81 = scmp.eq.s32.totalorder %s19, 0
    %p82 = por %p80, %p81
    %p83 = scmp.ne.s32.totalorder %s69, %s70
    %p84 = scmp.eq.s32.totalorder %s20, 1
    %p85 = por %p83, %p84
    %p87 = scmp.ne.s32.totalorder %s70, %s86
    %p88 = scmp.eq.s32.totalorder %s20, 0
    %p89 = por %p87, %p88
    %s91 = sadd.s32 %s90, 1
    %p94 = scmp.eq.s32.totalorder %s14, 1
    %p95 = scmp.ne.s32.totalorder %s90, %s92
    %p96 = scmp.eq.s32.totalorder %s14, 0
    %p97 = por %p95, %p96
    %p98 = scmp.ne.s32.totalorder %s90, %s92
    %p99 = scmp.eq.s32.totalorder %s19, 1
    %p100 = por %p98, %p99
    %p101 = scmp.ne.s32.totalorder %s92, %s93
    %p102 = scmp.eq.s32.totalorder %s19, 0
    %p103 = por %p101, %p102
    %p104 = scmp.ne.s32.totalorder %s92, %s93
    %p105 = scmp.eq.s32.totalorder %s20, 1
    %p106 = por %p104, %p105
    %p108 = scmp.ne.s32.totalorder %s93, %s107
    %p109 = scmp.eq.s32.totalorder %s20, 0
    %p110 = por %p108, %p109
    %s112 = sadd.s32 %s111, 1
    %p115 = scmp.eq.s32.totalorder %s14, 1
    %p116 = scmp.ne.s32.totalorder %s111, %s113
    %p117 = scmp.eq.s32.totalorder %s14, 0
    %p118 = por %p116, %p117
    %p119 = scmp.ne.s32.totalorder %s111, %s113
    %p120 = scmp.eq.s32.totalorder %s19, 1
    %p121 = por %p119, %p120
    %p122 = scmp.ne.s32.totalorder %s113, %s114
    %p123 = scmp.eq.s32.totalorder %s19, 0
    %p124 = por %p122, %p123
    %p125 = scmp.ne.s32.totalorder %s113, %s114
    %p126 = scmp.eq.s32.totalorder %s20, 1
    %p127 = por %p125, %p126
    %p129 = scmp.ne.s32.totalorder %s114, %s128
    %p130 = scmp.eq.s32.totalorder %s20, 0
    %p131 = por %p129, %p130
    %s132 = ssub.s32 %s21, %s33
    %s133 = ssub.s32 %s22, %s29
    %s134 = sor.u32 %s132, %s133
    %p135 = scmp.eq.s32.totalorder %s134, 0
    %s137 = sadd.s32 %s136, 1
    %s138 = scalar_select %p135, %s136, %s137
    %p141 = pneg %p135
    %p142 = scmp.eq.s32.totalorder %s14, 1
    %p143 = por %p141, %p142
    %p144 = scmp.ne.s32.totalorder %s136, %s139
    %p145 = scmp.eq.s32.totalorder %s14, 0
    %p146 = por %p144, %p145
    %p147 = scmp.ne.s32.totalorder %s136, %s139
    %p148 = scmp.eq.s32.totalorder %s19, 1
    %p149 = por %p147, %p148
    %p150 = scmp.ne.s32.totalorder %s139, %s140
    %p151 = scmp.eq.s32.totalorder %s19, 0
    %p152 = por %p150, %p151
    %p153 = scmp.ne.s32.totalorder %s139, %s140
    %p154 = scmp.eq.s32.totalorder %s20, 1
    %p155 = por %p153, %p154
    %p157 = scmp.ne.s32.totalorder %s140, %s156
    %p158 = scmp.eq.s32.totalorder %s20, 0
    %p159 = por %p157, %p158
    %p160 = scmp.le.s32.totalorder 1, %s14
    %p161 = scmp.lt.s32.totalorder %s14, 3
    %p162 = pnand %p160, %p161
    %p163 = pneg %p162
    // Predicated region
    $region9: #{attention_block.5} parent=5 // pred_check
      _
    $region10: #{attention_block.5} parent=5 // pred_check_branch
      %165 = sbr.rel (%p162) target = $region12
    $region11: #{attention_block.5} parent=5 // pred_region
      %s166 = ssub.s32 %s14, 1
      // Predicated region
      $region13: #{attention_block.5} parent=11 // pred_check
        %p167 = pneg %p103
      $region14: #{attention_block.5} parent=11 // pred_check_branch
        %169 = sbr.rel (%p167) target = $region16
      $region15: #{attention_block.5} parent=11 // pred_region
        _
      $region16: #{attention_block.5} parent=11 // pred_fallthru
        _
      // Predicated region
      $region17: #{attention_block.5} parent=11 // pred_check
        %p170 = pneg %p124
      $region18: #{attention_block.5} parent=11 // pred_check_branch
        %172 = sbr.rel (%p170) target = $region20
      $region19: #{attention_block.5} parent=11 // pred_region
        _
      $region20: #{attention_block.5} parent=11 // pred_fallthru
        _
    $region12: #{attention_block.5} parent=5 // pred_fallthru
      _
    %p173 = scmp.lt.s32.totalorder %s14, 2
    // Predicated region
    $region21: #{attention_block.5} parent=5 // pred_check
      %p174 = pneg %p173
    $region22: #{attention_block.5} parent=5 // pred_check_branch
      %176 = sbr.rel (%p174) target = $region24
    $region23: #{attention_block.5} parent=5 // pred_region
      // Predicated region
      $region25: #{attention_block.5} parent=23 // pred_check
        %p177 = pneg %p48
      $region26: #{attention_block.5} parent=23 // pred_check_branch
        %179 = sbr.rel (%p177) target = $region28
      $region27: #{attention_block.5} parent=23 // pred_region
        %s180 = smul.u32 2, %s22
        %p181 = scmp.lt.s32.totalorder %s21, 1
        %s182 = scalar_select %p181, %s21, 1
        %p183 = scmp.lt.s32.totalorder %s180, 1
        %s184 = scalar_select %p183, %s180, 1
        %s185 = smul.addr %s182, 2
        %s186 = sadd.s32 %s184, %s185
        %s187 = smul.addr %s186, 4
        %s188 = scalar_lea.vmem %s0, %s187
        %s189 = smul.u32 2, %s22
      $region28: #{attention_block.5} parent=23 // pred_fallthru
        _
      // Predicated region
      $region29: #{attention_block.5} parent=23 // pred_check
        %p190 = pneg %p76
      $region30: #{attention_block.5} parent=23 // pred_check_branch
        %192 = sbr.rel (%p190) target = $region32
      $region31: #{attention_block.5} parent=23 // pred_region
        %s193 = smul.u32 2, %s22
        %p194 = scmp.lt.s32.totalorder %s21, 1
        %s195 = scalar_select %p194, %s21, 1
        %p196 = scmp.lt.s32.totalorder %s193, 1
        %s197 = scalar_select %p196, %s193, 1
        %s198 = smul.addr %s195, 2
        %s199 = sadd.s32 %s197, %s198
        %s200 = scalar_lea.vmem %s1, %s199
        %s201 = smul.u32 2, %s22
      $region32: #{attention_block.5} parent=23 // pred_fallthru
        _
    $region24: #{attention_block.5} parent=5 // pred_fallthru
      _
    %p202 = scmp.le.s32.totalorder 1, %s14
    %p203 = scmp.lt.s32.totalorder %s14, 3
    %p204 = pnand %p202, %p203
    %p205 = pneg %p204
    // Predicated region
    $region33: #{attention_block.5} parent=5 // pred_check
      _
    $region34: #{attention_block.5} parent=5 // pred_check_branch
      %207 = sbr.rel (%p204) target = $region36
    $region35: #{attention_block.5} parent=5 // pred_region
      %s208 = ssub.s32 %s14, 1
      %s209 = smul.u32 2, %s24
      %p210 = scmp.lt.s32.totalorder %s23, 1
      %s211 = scalar_select %p210, %s23, 1
      %p212 = scmp.lt.s32.totalorder %s209, 1
      %s213 = scalar_select %p212, %s209, 1
      %s214 = smul.addr %s211, 2
      %s215 = sadd.s32 %s213, %s214
      %s216 = smul.addr %s215, 4
      %s217 = scalar_lea.vmem %s0, %s216
      %p218 = pneg %p54
      %p219 = pneg %p51
      %s220 = smul.u32 2, %s24
      %p221 = scmp.lt.s32.totalorder %s23, 1
      %s222 = scalar_select %p221, %s23, 1
      %p223 = scmp.lt.s32.totalorder %s220, 1
      %s224 = scalar_select %p223, %s220, 1
      %s225 = smul.addr %s222, 2
      %s226 = sadd.s32 %s224, %s225
      %s227 = scalar_lea.vmem %s1, %s226
      %p228 = pneg %p82
      %p229 = pneg %p79
      %p230 = pneg %p103
      %p231 = pneg %p100
      %p232 = pneg %p124
      %p233 = pneg %p121
      %p234 = pneg %p152
      %p235 = pneg %p149
      %s236 = smul.u32 2, %s24
      %p237 = scmp.lt.s32.totalorder %s23, 1
      %s238 = scalar_select %p237, %s23, 1
      %p239 = scmp.lt.s32.totalorder %s236, 1
      %s240 = scalar_select %p239, %s236, 1
      %s241 = smul.addr %s238, 2
      %s242 = sadd.s32 %s240, %s241
      %s243 = smul.addr %s242, 4
      %s244 = scalar_lea.vmem %s4, %s243
      %s245 = smul.u32 2, %s24
      %p246 = scmp.lt.s32.totalorder %s23, 1
      %s247 = scalar_select %p246, %s23, 1
      %p248 = scmp.lt.s32.totalorder %s245, 1
      %s249 = scalar_select %p248, %s245, 1
      %s250 = smul.addr %s247, 2
      %s251 = sadd.s32 %s249, %s250
      %s252 = smul.addr %s251, 4
      %s253 = scalar_lea.vmem %s0, %s252
      %s254 = smul.u32 2, %s24
      %s255 = smul.u32 2, %s24
      %p256 = scmp.lt.s32.totalorder %s23, 1
      %s257 = scalar_select %p256, %s23, 1
      %p258 = scmp.lt.s32.totalorder %s255, 1
      %s259 = scalar_select %p258, %s255, 1
      %s260 = smul.addr %s257, 2
      %s261 = sadd.s32 %s259, %s260
      %s262 = scalar_lea.vmem %s1, %s261
      %s263 = smul.u32 2, %s24
      %s264 = smul.u32 2, %s24
      %p265 = scmp.lt.s32.totalorder %s23, 1
      %s266 = scalar_select %p265, %s23, 1
      %p267 = scmp.lt.s32.totalorder %s264, 1
      %s268 = scalar_select %p267, %s264, 1
      %s269 = smul.addr %s266, 2
      %s270 = sadd.s32 %s268, %s269
      %s271 = smul.addr %s270, 4
      %s272 = scalar_lea.vmem %s4, %s271
      %s273 = smul.u32 2, %s24
      %v274 = vld [vmem:[%s262] sm:$0x3]
      %v275 = vld [vmem:[#allocation2] sm:$0x1]
      %277 = vset.pattern.permute.xlu0 0
      %278 = vperm.xlu0 %277, %v275
      %v279 = vpop.permute.xlu0 %278
      %v281 = vlaneseq
      %v282 = vshrl.u32 %v281, 7
      %v283 = vsub.s32 0, %v282
      %v284 = vrot.slane %v279, %v283
      %v285 = vmul.f32 %v274, %v284
      %v286 = vld [vmem:[#allocation3] sm:$0x1]
      %288 = vset.pattern.permute.xlu0 0
      %289 = vperm.xlu0 %288, %v286
      %v290 = vpop.permute.xlu0 %289
      %v292 = vlaneseq
      %v293 = vshrl.u32 %v292, 7
      %v294 = vsub.s32 0, %v293
      %v295 = vrot.slane %v290, %v294
      %v296 = vadd.f32 %v285, %v295
      %v297 = vxor.u32 %v296, 2147483648
      %v298 = vmul.f32 %v297, 1.442695
      %v299 = vpow.pop %v298
      %v300 = vadd.f32 %v299, 1.0
      %v301 = vrcp.pop %v300
      %v302 = vmul.f32 1.0, %v301
      %v303 = vld [vmem:[%s253] sm:$0xff]
      %v305 = vlaneseq
      %v306 = vshrl.u32 %v305, 7
      %v307 = vsub.s32 0, %v306
      %v308 = vrot.slane %v302, %v307
      %v309 = vlaneseq
      %v310 = vshrl.u32 %v309, 7
      %v311 = vsub.s32 1, %v310
      %v312 = vrot.slane %v302, %v311
      %v313 = vcombine.low %v308, %v312
      %v315 = vmul.f32 %v303, %v313
      %316 = vst [vmem:[%s272] sm:$0xff] %v315
      %s317 = smul.u32 2, %s24
      %p318 = scmp.lt.s32.totalorder %s23, 1
      %s319 = scalar_select %p318, %s23, 1
      %p320 = scmp.lt.s32.totalorder %s317, 1
      %s321 = scalar_select %p320, %s317, 1
      %s322 = smul.addr %s319, 2
      %s323 = sadd.s32 %s321, %s322
      %s324 = smul.addr %s323, 4
      %s325 = scalar_lea.vmem %s4, %s324
      // Predicated region
      $region37: #{attention_block.5} parent=35 // pred_check
        %p326 = pneg %p149
      $region38: #{attention_block.5} parent=35 // pred_check_branch
        %328 = sbr.rel (%p326) target = $region40
      $region39: #{attention_block.5} parent=35 // pred_region
        %s329 = smul.u32 2, %s24
      $region40: #{attention_block.5} parent=35 // pred_fallthru
        _
    $region36: #{attention_block.5} parent=5 // pred_fallthru
      _
    %p330 = scmp.le.s32.totalorder 2, %s14
    // Predicated region
    $region41: #{attention_block.5} parent=5 // pred_check
      %p331 = pneg %p330
    $region42: #{attention_block.5} parent=5 // pred_check_branch
      %333 = sbr.rel (%p331) target = $region44
    $region43: #{attention_block.5} parent=5 // pred_region
      %s334 = ssub.s32 %s14, 2
      // Predicated region
      $region45: #{attention_block.5} parent=43 // pred_check
        %p335 = pneg %p155
      $region46: #{attention_block.5} parent=43 // pred_check_branch
        %337 = sbr.rel (%p335) target = $region48
      $region47: #{attention_block.5} parent=43 // pred_region
        %s338 = smul.u32 2, %s26
        %p339 = scmp.lt.s32.totalorder %s25, 1
        %s340 = scalar_select %p339, %s25, 1
        %p341 = scmp.lt.s32.totalorder %s338, 1
        %s342 = scalar_select %p341, %s338, 1
        %s343 = smul.addr %s340, 2
        %s344 = sadd.s32 %s342, %s343
        %s345 = smul.addr %s344, 4
        %s346 = scalar_lea.vmem %s4, %s345
      $region48: #{attention_block.5} parent=43 // pred_fallthru
        _
    $region44: #{attention_block.5} parent=5 // pred_fallthru
      _
  $region6: #{attention_block.5} parent=0 // loop_footer
    %s18 = sadd.s32 1, %s14
  $region7: #{attention_block.5} parent=0 // loop_footer_branch
    %13 = sbr.rel target = $region3
  $region8: #{attention_block.5} parent=0 // loop_exit
    _

// kernel: attention_block.4
$region0: #{attention_block.4}
  #allocation0 [shape = 'u32[]', space=smem, size = 0x4, offset = 0x4, fixed_abs, tag = 'smem constant byte address 0x4 - core index']
  #allocation1 [shape = 'u32[144,128]{1,0:T(1,128)}', space=vmem, size = 0x12000, scoped, tag = 'internal scratch']
  %s0 = inlined_call_operand.vmem [shape: f32[2,4,256], index: 0, kind: input, shape index: {}]
  %s1 = inlined_call_operand.vmem [shape: f32[2,4,256], index: 1, kind: input, shape index: {}]
  %s2 = inlined_call_operand.vmem [shape: f32[8,4], index: 2, kind: input, shape index: {}]
  %s3 = inlined_call_operand.vmem [shape: f32[8,4], index: 3, kind: input, shape index: {}]
  %s4 = inlined_call_operand.vmem [shape: f32[8,1], index: 4, kind: input, shape index: {}]
  %s5 = inlined_call_operand.vmem [shape: f32[8,1], index: 5, kind: input, shape index: {}]
  %s6 = inlined_call_operand.vmem [shape: f32[2,1,256], index: 6, kind: output, shape index: {0}]
  %s7 = inlined_call_operand.vmem [shape: f32[2,1,1], index: 7, kind: output, shape index: {1}]
  %s8 = inlined_call_operand.vmem [shape: f32[2,1,1], index: 8, kind: output, shape index: {2}]
  %9 = xla_tuple %s6, %s7, %s8
  %s10 = sld [smem:[#allocation0]]
  $region77: #{attention_block.4} parent=0
    _
  %s12 = ssub.s32 1, %s10
  %s13 = scalar_select 0, %s12, %s10
  loop: start=0, step=1, limit=4
  $region2: #{attention_block.4} parent=0 // loop_pre_header
    _
  $region3: #{attention_block.4} parent=0 // loop_header
    %s15 = sphi 0, %s19
    %p16 = scmp.ge.s32.totalorder %s15, 4
    %s22 = sphi 0, %s34
    %s23 = sphi 0, %s30
    %s24 = sphi 0, %s22
    %s25 = sphi 0, %s23
    %s26 = sphi 0, %s24
    %s27 = sphi 0, %s25
    %s39 = sphi 0, %s41
    %s42 = sphi 0, %s39
    %s43 = sphi 0, %s42
    %s59 = sphi 0, %s43
    %s67 = sphi 0, %s69
    %s70 = sphi 0, %s67
    %s71 = sphi 0, %s70
    %s87 = sphi 0, %s71
    %s91 = sphi 0, %s91
    %s93 = sphi 0, %s91
    %s94 = sphi 0, %s93
    %s108 = sphi 0, %s94
    %s112 = sphi 0, %s112
    %s114 = sphi 0, %s112
    %s115 = sphi 0, %s114
    %s129 = sphi 0, %s115
    %s133 = sphi 0, %s133
    %s135 = sphi 0, %s133
    %s136 = sphi 0, %s135
    %s150 = sphi 0, %s136
    %s154 = sphi 0, %s154
    %s156 = sphi 0, %s154
    %s157 = sphi 0, %s156
    %s171 = sphi 0, %s157
    %s179 = sphi 0, %s181
    %s182 = sphi 0, %s179
    %s183 = sphi 0, %s182
    %s199 = sphi 0, %s183
    %s205 = sphi 0, %s207
    %s208 = sphi 0, %s205
    %s209 = sphi 0, %s208
    %s225 = sphi 0, %s209
    %s231 = sphi 0, %s233
    %s234 = sphi 0, %s231
    %s235 = sphi 0, %s234
    %s251 = sphi 0, %s235
  $region4: #{attention_block.4} parent=0 // loop_header_branch
    %18 = sbr.rel (%p16) target = $region8
  $region5: #{attention_block.4} parent=0 // loop_body
    %s20 = ssub.s32 %s15, 1
    %s21 = ssub.s32 %s15, 2
    %s28 = sadd.s32 1, %s23
    %p29 = scmp.ge.s32.totalorder %s28, 1
    %s30 = scalar_select %p29, 0, %s28
    %s31 = sadd.s32 1, %s22
    %s32 = scalar_select %p29, %s31, %s22
    %p33 = scmp.ge.s32.totalorder %s32, 2
    %s34 = scalar_select %p33, 0, %s32
    %s35 = ssub.s32 %s22, %s34
    %s36 = ssub.s32 %s23, %s30
    %s37 = sor.u32 %s35, %s36
    %p38 = scmp.eq.s32.totalorder %s37, 0
    %s40 = sadd.s32 %s39, 1
    %s41 = scalar_select %p38, %s39, %s40
    %p44 = pneg %p38
    %p45 = scmp.eq.s32.totalorder %s15, 1
    %p46 = por %p44, %p45
    %p47 = scmp.ne.s32.totalorder %s39, %s42
    %p48 = scmp.eq.s32.totalorder %s15, 0
    %p49 = por %p47, %p48
    %p50 = scmp.ne.s32.totalorder %s39, %s42
    %p51 = scmp.eq.s32.totalorder %s20, 1
    %p52 = por %p50, %p51
    %p53 = scmp.ne.s32.totalorder %s42, %s43
    %p54 = scmp.eq.s32.totalorder %s20, 0
    %p55 = por %p53, %p54
    %p56 = scmp.ne.s32.totalorder %s42, %s43
    %p57 = scmp.eq.s32.totalorder %s21, 1
    %p58 = por %p56, %p57
    %p60 = scmp.ne.s32.totalorder %s43, %s59
    %p61 = scmp.eq.s32.totalorder %s21, 0
    %p62 = por %p60, %p61
    %s63 = ssub.s32 %s22, %s34
    %s64 = ssub.s32 %s23, %s30
    %s65 = sor.u32 %s63, %s64
    %p66 = scmp.eq.s32.totalorder %s65, 0
    %s68 = sadd.s32 %s67, 1
    %s69 = scalar_select %p66, %s67, %s68
    %p72 = pneg %p66
    %p73 = scmp.eq.s32.totalorder %s15, 1
    %p74 = por %p72, %p73
    %p75 = scmp.ne.s32.totalorder %s67, %s70
    %p76 = scmp.eq.s32.totalorder %s15, 0
    %p77 = por %p75, %p76
    %p78 = scmp.ne.s32.totalorder %s67, %s70
    %p79 = scmp.eq.s32.totalorder %s20, 1
    %p80 = por %p78, %p79
    %p81 = scmp.ne.s32.totalorder %s70, %s71
    %p82 = scmp.eq.s32.totalorder %s20, 0
    %p83 = por %p81, %p82
    %p84 = scmp.ne.s32.totalorder %s70, %s71
    %p85 = scmp.eq.s32.totalorder %s21, 1
    %p86 = por %p84, %p85
    %p88 = scmp.ne.s32.totalorder %s71, %s87
    %p89 = scmp.eq.s32.totalorder %s21, 0
    %p90 = por %p88, %p89
    %s92 = sadd.s32 %s91, 1
    %p95 = scmp.eq.s32.totalorder %s15, 1
    %p96 = scmp.ne.s32.totalorder %s91, %s93
    %p97 = scmp.eq.s32.totalorder %s15, 0
    %p98 = por %p96, %p97
    %p99 = scmp.ne.s32.totalorder %s91, %s93
    %p100 = scmp.eq.s32.totalorder %s20, 1
    %p101 = por %p99, %p100
    %p102 = scmp.ne.s32.totalorder %s93, %s94
    %p103 = scmp.eq.s32.totalorder %s20, 0
    %p104 = por %p102, %p103
    %p105 = scmp.ne.s32.totalorder %s93, %s94
    %p106 = scmp.eq.s32.totalorder %s21, 1
    %p107 = por %p105, %p106
    %p109 = scmp.ne.s32.totalorder %s94, %s108
    %p110 = scmp.eq.s32.totalorder %s21, 0
    %p111 = por %p109, %p110
    %s113 = sadd.s32 %s112, 1
    %p116 = scmp.eq.s32.totalorder %s15, 1
    %p117 = scmp.ne.s32.totalorder %s112, %s114
    %p118 = scmp.eq.s32.totalorder %s15, 0
    %p119 = por %p117, %p118
    %p120 = scmp.ne.s32.totalorder %s112, %s114
    %p121 = scmp.eq.s32.totalorder %s20, 1
    %p122 = por %p120, %p121
    %p123 = scmp.ne.s32.totalorder %s114, %s115
    %p124 = scmp.eq.s32.totalorder %s20, 0
    %p125 = por %p123, %p124
    %p126 = scmp.ne.s32.totalorder %s114, %s115
    %p127 = scmp.eq.s32.totalorder %s21, 1
    %p128 = por %p126, %p127
    %p130 = scmp.ne.s32.totalorder %s115, %s129
    %p131 = scmp.eq.s32.totalorder %s21, 0
    %p132 = por %p130, %p131
    %s134 = sadd.s32 %s133, 1
    %p137 = scmp.eq.s32.totalorder %s15, 1
    %p138 = scmp.ne.s32.totalorder %s133, %s135
    %p139 = scmp.eq.s32.totalorder %s15, 0
    %p140 = por %p138, %p139
    %p141 = scmp.ne.s32.totalorder %s133, %s135
    %p142 = scmp.eq.s32.totalorder %s20, 1
    %p143 = por %p141, %p142
    %p144 = scmp.ne.s32.totalorder %s135, %s136
    %p145 = scmp.eq.s32.totalorder %s20, 0
    %p146 = por %p144, %p145
    %p147 = scmp.ne.s32.totalorder %s135, %s136
    %p148 = scmp.eq.s32.totalorder %s21, 1
    %p149 = por %p147, %p148
    %p151 = scmp.ne.s32.totalorder %s136, %s150
    %p152 = scmp.eq.s32.totalorder %s21, 0
    %p153 = por %p151, %p152
    %s155 = sadd.s32 %s154, 1
    %p158 = scmp.eq.s32.totalorder %s15, 1
    %p159 = scmp.ne.s32.totalorder %s154, %s156
    %p160 = scmp.eq.s32.totalorder %s15, 0
    %p161 = por %p159, %p160
    %p162 = scmp.ne.s32.totalorder %s154, %s156
    %p163 = scmp.eq.s32.totalorder %s20, 1
    %p164 = por %p162, %p163
    %p165 = scmp.ne.s32.totalorder %s156, %s157
    %p166 = scmp.eq.s32.totalorder %s20, 0
    %p167 = por %p165, %p166
    %p168 = scmp.ne.s32.totalorder %s156, %s157
    %p169 = scmp.eq.s32.totalorder %s21, 1
    %p170 = por %p168, %p169
    %p172 = scmp.ne.s32.totalorder %s157, %s171
    %p173 = scmp.eq.s32.totalorder %s21, 0
    %p174 = por %p172, %p173
    %s175 = ssub.s32 %s22, %s34
    %s176 = ssub.s32 %s23, %s30
    %s177 = sor.u32 %s175, %s176
    %p178 = scmp.eq.s32.totalorder %s177, 0
    %s180 = sadd.s32 %s179, 1
    %s181 = scalar_select %p178, %s179, %s180
    %p184 = pneg %p178
    %p185 = scmp.eq.s32.totalorder %s15, 1
    %p186 = por %p184, %p185
    %p187 = scmp.ne.s32.totalorder %s179, %s182
    %p188 = scmp.eq.s32.totalorder %s15, 0
    %p189 = por %p187, %p188
    %p190 = scmp.ne.s32.totalorder %s179, %s182
    %p191 = scmp.eq.s32.totalorder %s20, 1
    %p192 = por %p190, %p191
    %p193 = scmp.ne.s32.totalorder %s182, %s183
    %p194 = scmp.eq.s32.totalorder %s20, 0
    %p195 = por %p193, %p194
    %p196 = scmp.ne.s32.totalorder %s182, %s183
    %p197 = scmp.eq.s32.totalorder %s21, 1
    %p198 = por %p196, %p197
    %p200 = scmp.ne.s32.totalorder %s183, %s199
    %p201 = scmp.eq.s32.totalorder %s21, 0
    %p202 = por %p200, %p201
    %s203 = ssub.s32 %s22, %s34
    %p204 = scmp.eq.s32.totalorder %s203, 0
    %s206 = sadd.s32 %s205, 1
    %s207 = scalar_select %p204, %s205, %s206
    %p210 = pneg %p204
    %p211 = scmp.eq.s32.totalorder %s15, 1
    %p212 = por %p210, %p211
    %p213 = scmp.ne.s32.totalorder %s205, %s208
    %p214 = scmp.eq.s32.totalorder %s15, 0
    %p215 = por %p213, %p214
    %p216 = scmp.ne.s32.totalorder %s205, %s208
    %p217 = scmp.eq.s32.totalorder %s20, 1
    %p218 = por %p216, %p217
    %p219 = scmp.ne.s32.totalorder %s208, %s209
    %p220 = scmp.eq.s32.totalorder %s20, 0
    %p221 = por %p219, %p220
    %p222 = scmp.ne.s32.totalorder %s208, %s209
    %p223 = scmp.eq.s32.totalorder %s21, 1
    %p224 = por %p222, %p223
    %p226 = scmp.ne.s32.totalorder %s209, %s225
    %p227 = scmp.eq.s32.totalorder %s21, 0
    %p228 = por %p226, %p227
    %s229 = ssub.s32 %s22, %s34
    %p230 = scmp.eq.s32.totalorder %s229, 0
    %s232 = sadd.s32 %s231, 1
    %s233 = scalar_select %p230, %s231, %s232
    %p236 = pneg %p230
    %p237 = scmp.eq.s32.totalorder %s15, 1
    %p238 = por %p236, %p237
    %p239 = scmp.ne.s32.totalorder %s231, %s234
    %p240 = scmp.eq.s32.totalorder %s15, 0
    %p241 = por %p239, %p240
    %p242 = scmp.ne.s32.totalorder %s231, %s234
    %p243 = scmp.eq.s32.totalorder %s20, 1
    %p244 = por %p242, %p243
    %p245 = scmp.ne.s32.totalorder %s234, %s235
    %p246 = scmp.eq.s32.totalorder %s20, 0
    %p247 = por %p245, %p246
    %p248 = scmp.ne.s32.totalorder %s234, %s235
    %p249 = scmp.eq.s32.totalorder %s21, 1
    %p250 = por %p248, %p249
    %p252 = scmp.ne.s32.totalorder %s235, %s251
    %p253 = scmp.eq.s32.totalorder %s21, 0
    %p254 = por %p252, %p253
    %p255 = scmp.le.s32.totalorder 1, %s15
    %p256 = scmp.lt.s32.totalorder %s15, 3
    %p257 = pnand %p255, %p256
    %p258 = pneg %p257
    // Predicated region
    $region9: #{attention_block.4} parent=5 // pred_check
      _
    $region10: #{attention_block.4} parent=5 // pred_check_branch
      %260 = sbr.rel (%p257) target = $region12
    $region11: #{attention_block.4} parent=5 // pred_region
      %s261 = ssub.s32 %s15, 1
      // Predicated region
      $region13: #{attention_block.4} parent=11 // pred_check
        %p262 = pneg %p104
      $region14: #{attention_block.4} parent=11 // pred_check_branch
        %264 = sbr.rel (%p262) target = $region16
      $region15: #{attention_block.4} parent=11 // pred_region
        _
      $region16: #{attention_block.4} parent=11 // pred_fallthru
        _
      // Predicated region
      $region17: #{attention_block.4} parent=11 // pred_check
        %p265 = pneg %p125
      $region18: #{attention_block.4} parent=11 // pred_check_branch
        %267 = sbr.rel (%p265) target = $region20
      $region19: #{attention_block.4} parent=11 // pred_region
        _
      $region20: #{attention_block.4} parent=11 // pred_fallthru
        _
      // Predicated region
      $region21: #{attention_block.4} parent=11 // pred_check
        %p268 = pneg %p146
      $region22: #{attention_block.4} parent=11 // pred_check_branch
        %270 = sbr.rel (%p268) target = $region24
      $region23: #{attention_block.4} parent=11 // pred_region
        _
      $region24: #{attention_block.4} parent=11 // pred_fallthru
        _
      // Predicated region
      $region25: #{attention_block.4} parent=11 // pred_check
        %p271 = pneg %p167
      $region26: #{attention_block.4} parent=11 // pred_check_branch
        %273 = sbr.rel (%p271) target = $region28
      $region27: #{attention_block.4} parent=11 // pred_region
        _
      $region28: #{attention_block.4} parent=11 // pred_fallthru
        _
    $region12: #{attention_block.4} parent=5 // pred_fallthru
      _
    %p274 = scmp.lt.s32.totalorder %s15, 2
    // Predicated region
    $region29: #{attention_block.4} parent=5 // pred_check
      %p275 = pneg %p274
    $region30: #{attention_block.4} parent=5 // pred_check_branch
      %277 = sbr.rel (%p275) target = $region32
    $region31: #{attention_block.4} parent=5 // pred_region
      // Predicated region
      $region33: #{attention_block.4} parent=31 // pred_check
        %p278 = pneg %p49
      $region34: #{attention_block.4} parent=31 // pred_check_branch
        %280 = sbr.rel (%p278) target = $region36
      $region35: #{attention_block.4} parent=31 // pred_region
        %s281 = smul.u32 2, %s23
        %p282 = scmp.lt.s32.totalorder %s22, 1
        %s283 = scalar_select %p282, %s22, 1
        %p284 = scmp.lt.s32.totalorder %s281, 1
        %s285 = scalar_select %p284, %s281, 1
        %s286 = smul.addr %s283, 2
        %s287 = sadd.s32 %s285, %s286
        %s288 = smul.addr %s287, 4
        %s289 = scalar_lea.vmem %s0, %s288
        %s290 = smul.u32 2, %s23
      $region36: #{attention_block.4} parent=31 // pred_fallthru
        _
      // Predicated region
      $region37: #{attention_block.4} parent=31 // pred_check
        %p291 = pneg %p77
      $region38: #{attention_block.4} parent=31 // pred_check_branch
        %293 = sbr.rel (%p291) target = $region40
      $region39: #{attention_block.4} parent=31 // pred_region
        %s294 = smul.u32 2, %s23
        %p295 = scmp.lt.s32.totalorder %s22, 1
        %s296 = scalar_select %p295, %s22, 1
        %p297 = scmp.lt.s32.totalorder %s294, 1
        %s298 = scalar_select %p297, %s294, 1
        %s299 = smul.addr %s296, 2
        %s300 = sadd.s32 %s298, %s299
        %s301 = smul.addr %s300, 4
        %s302 = scalar_lea.vmem %s1, %s301
        %s303 = smul.u32 2, %s23
      $region40: #{attention_block.4} parent=31 // pred_fallthru
        _
    $region32: #{attention_block.4} parent=5 // pred_fallthru
      _
    %p304 = scmp.le.s32.totalorder 1, %s15
    %p305 = scmp.lt.s32.totalorder %s15, 3
    %p306 = pnand %p304, %p305
    %p307 = pneg %p306
    // Predicated region
    $region41: #{attention_block.4} parent=5 // pred_check
      _
    $region42: #{attention_block.4} parent=5 // pred_check_branch
      %309 = sbr.rel (%p306) target = $region44
    $region43: #{attention_block.4} parent=5 // pred_region
      %s310 = ssub.s32 %s15, 1
      %s311 = smul.u32 2, %s25
      %p312 = scmp.lt.s32.totalorder %s24, 1
      %s313 = scalar_select %p312, %s24, 1
      %p314 = scmp.lt.s32.totalorder %s311, 1
      %s315 = scalar_select %p314, %s311, 1
      %s316 = smul.addr %s313, 2
      %s317 = sadd.s32 %s315, %s316
      %s318 = smul.addr %s317, 4
      %s319 = scalar_lea.vmem %s0, %s318
      %p320 = pneg %p55
      %p321 = pneg %p52
      %s322 = smul.u32 2, %s25
      %p323 = scmp.lt.s32.totalorder %s24, 1
      %s324 = scalar_select %p323, %s24, 1
      %p325 = scmp.lt.s32.totalorder %s322, 1
      %s326 = scalar_select %p325, %s322, 1
      %s327 = smul.addr %s324, 2
      %s328 = sadd.s32 %s326, %s327
      %s329 = smul.addr %s328, 4
      %s330 = scalar_lea.vmem %s1, %s329
      %p331 = pneg %p83
      %p332 = pneg %p80
      %p333 = pneg %p104
      %p334 = pneg %p101
      %p335 = pneg %p125
      %p336 = pneg %p122
      %p337 = pneg %p146
      %p338 = pneg %p143
      %p339 = pneg %p167
      %p340 = pneg %p164
      %p341 = pneg %p195
      %p342 = pneg %p192
      %s343 = smul.u32 2, %s25
      %p344 = scmp.lt.s32.totalorder %s24, 1
      %s345 = scalar_select %p344, %s24, 1
      %p346 = scmp.lt.s32.totalorder %s343, 1
      %s347 = scalar_select %p346, %s343, 1
      %s348 = smul.addr %s345, 2
      %s349 = sadd.s32 %s347, %s348
      %s350 = scalar_lea.vmem %s6, %s349
      %p351 = pneg %p221
      %p352 = pneg %p218
      %p353 = scmp.lt.s32.totalorder %s24, 1
      %s354 = scalar_select %p353, %s24, 1
      %s355 = scalar_lea.vmem %s7, %s354
      %p356 = pneg %p247
      %p357 = pneg %p244
      %p358 = scmp.lt.s32.totalorder %s24, 1
      %s359 = scalar_select %p358, %s24, 1
      %s360 = scalar_lea.vmem %s8, %s359
      %s361 = smul.u32 2, %s25
      %p362 = scmp.lt.s32.totalorder %s24, 1
      %s363 = scalar_select %p362, %s24, 1
      %p364 = scmp.lt.s32.totalorder %s361, 1
      %s365 = scalar_select %p364, %s361, 1
      %s366 = smul.addr %s363, 2
      %s367 = sadd.s32 %s365, %s366
      %s368 = smul.addr %s367, 4
      %s369 = scalar_lea.vmem %s0, %s368
      %s370 = smul.u32 2, %s25
      %s371 = smul.u32 2, %s25
      %p372 = scmp.lt.s32.totalorder %s24, 1
      %s373 = scalar_select %p372, %s24, 1
      %p374 = scmp.lt.s32.totalorder %s371, 1
      %s375 = scalar_select %p374, %s371, 1
      %s376 = smul.addr %s373, 2
      %s377 = sadd.s32 %s375, %s376
      %s378 = smul.addr %s377, 4
      %s379 = scalar_lea.vmem %s1, %s378
      %s380 = smul.u32 2, %s25
      %s381 = smul.u32 2, %s25
      %p382 = scmp.lt.s32.totalorder %s24, 1
      %s383 = scalar_select %p382, %s24, 1
      %p384 = scmp.lt.s32.totalorder %s381, 1
      %s385 = scalar_select %p384, %s381, 1
      %s386 = smul.addr %s383, 2
      %s387 = sadd.s32 %s385, %s386
      %s388 = scalar_lea.vmem %s6, %s387
      %s389 = smul.u32 2, %s25
      %p390 = scmp.lt.s32.totalorder %s24, 1
      %s391 = scalar_select %p390, %s24, 1
      %s392 = scalar_lea.vmem %s7, %s391
      %p393 = scmp.lt.s32.totalorder %s24, 1
      %s394 = scalar_select %p393, %s24, 1
      %s395 = scalar_lea.vmem %s8, %s394
      %p396 = scmp.eq.s32.totalorder %s25, 0
      // Predicated region
      $region45: #{attention_block.4} parent=43 // pred_check
        %p397 = pneg %p396
      $region46: #{attention_block.4} parent=43 // pred_check_branch
        %399 = sbr.rel (%p397) target = $region48
      $region47: #{attention_block.4} parent=43 // pred_region
        %vm400 = vcmask 0
        %401 = vst.msk [vmem:[%s392] sm:$0x1] %vm400, 0.0
        %402 = vst.msk [vmem:[%s395] sm:$0x1] %vm400, 0.0
      $region48: #{attention_block.4} parent=43 // pred_fallthru
        _
      %v403 = vld [vmem:[%s2] sm:$0xff]
      %v404 = vld [vmem:[%s369] sm:$0xff]
      %v405 = vld [vmem:[%s3] sm:$0xff]
      %v406 = vld [vmem:[%s379] sm:$0xff]
      %v408 = vcombine.high %v406, %v406
      %vm409 = vcmask 31744
      %v411 = vsel %vm409, %v405, 0
      %vm413 = vcmask 1043456
      %v414 = vsel %vm413, %v406, 0
      %v416 = vsel %vm413, %v408, 0
      %418 = vmatprep.subr.mxu0 0.0
      %419 = vmatpush1.msra.mxu0 0.0
      %420 = vmatprep.subr.mxu0 0.0
      %421 = vmatpush1.msra.mxu0 0.0
      %422 = vmatprep.subr.mxu0 0.0
      %423 = vmatpush1.msra.mxu0 0.0
      %424 = vmatprep.subr.mxu0 0.0
      %425 = vmatpush1.msra.mxu0 0.0
      %426 = vmatprep.subr.mxu0 0.0
      %427 = vmatpush1.msra.mxu0 0.0
      %428 = vmatprep.subr.mxu0 0.0
      %429 = vmatpush1.msra.mxu0 0.0
      %430 = vmatprep.subr.mxu0 0.0
      %431 = vmatpush1.msra.mxu0 0.0
      %432 = vmatprep.subr.mxu0 0.0
      %433 = vmatpush1.msra.mxu0 0.0
      %434 = vmatprep.subr.mxu0 0.0
      %435 = vmatpush1.msra.mxu0 0.0
      %436 = vmatprep.subr.mxu0 0.0
      %437 = vmatpush1.msra.mxu0 0.0
      %438 = vmatprep.subr.mxu0 0.0
      %439 = vmatpush1.msra.mxu0 0.0
      %440 = vmatprep.subr.mxu0 0.0
      %441 = vmatpush1.msra.mxu0 0.0
      %442 = vmatprep.subr.mxu0 0.0
      %443 = vmatpush1.msra.mxu0 0.0
      %444 = vmatprep.subr.mxu0 0.0
      %445 = vmatpush1.msra.mxu0 0.0
      %446 = vmatprep.subr.mxu0 0.0
      %447 = vmatpush1.msra.mxu0 0.0
      %448 = vmatprep.subr.mxu0 %v416
      %449 = vmatpush1.msra.mxu0 %v414
      %450 = vmatprep.subr.mxu0 0.0
      %451 = vmatpush2.msra.mxu0 0.0
      %452 = vmatprep.subr.mxu0 0.0
      %453 = vmatpush2.msra.mxu0 0.0
      %454 = vmatprep.subr.mxu0 0.0
      %455 = vmatpush2.msra.mxu0 0.0
      %456 = vmatprep.subr.mxu0 0.0
      %457 = vmatpush2.msra.mxu0 0.0
      %458 = vmatprep.subr.mxu0 0.0
      %459 = vmatpush2.msra.mxu0 0.0
      %460 = vmatprep.subr.mxu0 0.0
      %461 = vmatpush2.msra.mxu0 0.0
      %462 = vmatprep.subr.mxu0 0.0
      %463 = vmatpush2.msra.mxu0 0.0
      %464 = vmatprep.subr.mxu0 0.0
      %465 = vmatpush2.msra.mxu0 0.0
      %466 = vmatprep.subr.mxu0 0.0
      %467 = vmatpush2.msra.mxu0 0.0
      %468 = vmatprep.subr.mxu0 0.0
      %469 = vmatpush2.msra.mxu0 0.0
      %470 = vmatprep.subr.mxu0 0.0
      %471 = vmatpush2.msra.mxu0 0.0
      %472 = vmatprep.subr.mxu0 0.0
      %473 = vmatpush2.msra.mxu0 0.0
      %474 = vmatprep.subr.mxu0 0.0
      %475 = vmatpush2.msra.mxu0 0.0
      %476 = vmatprep.subr.mxu0 0.0
      %477 = vmatpush2.msra.mxu0 0.0
      %478 = vmatprep.subr.mxu0 0.0
      %479 = vmatpush2.msra.mxu0 0.0
      %480 = vmatprep.subr.mxu0 0.0
      %481 = vmatpush2.msra.mxu0 0.0
      %482 = vmatprep.mubr.f32.mxu0 0.0
      %483 = vmatmul.mubr.f32.gmra.mxu0 %v411
      %v484 = vpop.f32.mrf.mxu0
      %v485 = vadd.f32 0.0, %v484
      %v486 = vpop.f32.mrf.mxu0
      %v487 = vadd.f32 0.0, %v486
      %488 = vdwg.mxu0
      %v490 = vcombine.high %v404, %v404
      %v492 = vsel %vm409, %v403, 0
      %v494 = vsel %vm413, %v404, 0
      %v496 = vsel %vm413, %v490, 0
      %498 = vmatprep.subr.mxu0 0.0
      %499 = vmatpush1.msra.mxu0 0.0
      %500 = vmatprep.subr.mxu0 0.0
      %501 = vmatpush1.msra.mxu0 0.0
      %502 = vmatprep.subr.mxu0 0.0
      %503 = vmatpush1.msra.mxu0 0.0
      %504 = vmatprep.subr.mxu0 0.0
      %505 = vmatpush1.msra.mxu0 0.0
      %506 = vmatprep.subr.mxu0 0.0
      %507 = vmatpush1.msra.mxu0 0.0
      %508 = vmatprep.subr.mxu0 0.0
      %509 = vmatpush1.msra.mxu0 0.0
      %510 = vmatprep.subr.mxu0 0.0
      %511 = vmatpush1.msra.mxu0 0.0
      %512 = vmatprep.subr.mxu0 0.0
      %513 = vmatpush1.msra.mxu0 0.0
      %514 = vmatprep.subr.mxu0 0.0
      %515 = vmatpush1.msra.mxu0 0.0
      %516 = vmatprep.subr.mxu0 0.0
      %517 = vmatpush1.msra.mxu0 0.0
      %518 = vmatprep.subr.mxu0 0.0
      %519 = vmatpush1.msra.mxu0 0.0
      %520 = vmatprep.subr.mxu0 0.0
      %521 = vmatpush1.msra.mxu0 0.0
      %522 = vmatprep.subr.mxu0 0.0
      %523 = vmatpush1.msra.mxu0 0.0
      %524 = vmatprep.subr.mxu0 0.0
      %525 = vmatpush1.msra.mxu0 0.0
      %526 = vmatprep.subr.mxu0 0.0
      %527 = vmatpush1.msra.mxu0 0.0
      %528 = vmatprep.subr.mxu0 %v496
      %529 = vmatpush1.msra.mxu0 %v494
      %530 = vmatprep.subr.mxu0 0.0
      %531 = vmatpush2.msra.mxu0 0.0
      %532 = vmatprep.subr.mxu0 0.0
      %533 = vmatpush2.msra.mxu0 0.0
      %534 = vmatprep.subr.mxu0 0.0
      %535 = vmatpush2.msra.mxu0 0.0
      %536 = vmatprep.subr.mxu0 0.0
      %537 = vmatpush2.msra.mxu0 0.0
      %538 = vmatprep.subr.mxu0 0.0
      %539 = vmatpush2.msra.mxu0 0.0
      %540 = vmatprep.subr.mxu0 0.0
      %541 = vmatpush2.msra.mxu0 0.0
      %542 = vmatprep.subr.mxu0 0.0
      %543 = vmatpush2.msra.mxu0 0.0
      %544 = vmatprep.subr.mxu0 0.0
      %545 = vmatpush2.msra.mxu0 0.0
      %546 = vmatprep.subr.mxu0 0.0
      %547 = vmatpush2.msra.mxu0 0.0
      %548 = vmatprep.subr.mxu0 0.0
      %549 = vmatpush2.msra.mxu0 0.0
      %550 = vmatprep.subr.mxu0 0.0
      %551 = vmatpush2.msra.mxu0 0.0
      %552 = vmatprep.subr.mxu0 0.0
      %553 = vmatpush2.msra.mxu0 0.0
      %554 = vmatprep.subr.mxu0 0.0
      %555 = vmatpush2.msra.mxu0 0.0
      %556 = vmatprep.subr.mxu0 0.0
      %557 = vmatpush2.msra.mxu0 0.0
      %558 = vmatprep.subr.mxu0 0.0
      %559 = vmatpush2.msra.mxu0 0.0
      %560 = vmatprep.subr.mxu0 0.0
      %561 = vmatpush2.msra.mxu0 0.0
      %562 = vmatprep.mubr.f32.mxu0 0.0
      %563 = vmatmul.mubr.f32.gmra.mxu0 %v492
      %v564 = vpop.f32.mrf.mxu0
      %v565 = vadd.f32 %v485, %v564
      %v566 = vpop.f32.mrf.mxu0
      %v567 = vadd.f32 %v487, %v566
      %568 = vdwg.mxu0
      %v569 = vld [vmem:[%s4] sm:$0xff]
      %571 = vset.pattern.permute.xlu0 0
      %572 = vperm.xlu0 %571, %v569
      %v573 = vpop.permute.xlu0 %572
      %v575 = vadd.f32 %v565, %v573
      %v576 = vadd.f32 %v567, %v573
      %v577 = vmax.f32 %v575, 0.0
      %v578 = vmax.f32 %v576, 0.0
      %v579 = vld [vmem:[%s5] sm:$0xff]
      %581 = vset.pattern.permute.xlu0 0
      %582 = vperm.xlu0 %581, %v579
      %v583 = vpop.permute.xlu0 %582
      %v585 = vmul.f32 %v577, %v583
      %v586 = vmul.f32 %v578, %v583
      %v587 = vrot.slane %v585, 4
      %v588 = vadd.f32 %v585, %v587
      %v589 = vrot.slane %v588, 2
      %v590 = vadd.f32 %v588, %v589
      %v591 = vrot.slane %v590, 1
      %v592 = vadd.f32 %v590, %v591
      %v593 = vrot.slane %v586, 4
      %v594 = vadd.f32 %v586, %v593
      %v595 = vrot.slane %v594, 2
      %v596 = vadd.f32 %v594, %v595
      %v597 = vrot.slane %v596, 1
      %v598 = vadd.f32 %v596, %v597
      %v601 = vcombine.low %v592, %v598
      %v603 = vunpack.c.l.s4 1966171168
      %v604 = vunpack.c.0.s8 %v603
      %v605 = vlaneseq
      %v606 = vshrl.u32 %v605, 7
      %v607 = vsub.s32 %v604, %v606
      %v608 = vrot.slane %v601, %v607
      %v610 = vunpack.c.l.s4 1966171168
      %v611 = vunpack.c.0.s8 %v610
      %v612 = vlaneseq
      %v613 = vshrl.u32 %v612, 7
      %v614 = vsub.s32 %v611, %v613
      %v615 = vrot.slane %v608, %v614
      %v617 = vlaneseq
      %vm618 = vcmp.ge.s32.totalorder %v617, 0
      %vm619 = vcmp.lt.s32.totalorder %v617, 256
      %vm620 = vmand %vm618, %vm619
      %621 = vst.msk [vmem:[%s388] sm:$0x3] %vm620, %v615
      %v622 = vld [vmem:[%s392] sm:$0x1]
      %v623 = vadd.f32 %v592, %v598
      %624 = vadd.xlane.f32.xlu0 %v623
      %v625 = vpop.xlane.xlu0 %624
      %v626 = vadd.f32 %v622, %v625
      %vm627 = vcmask 0
      %628 = vst.msk [vmem:[%s392] sm:$0x1] %vm627, %v626
      %v629 = vld [vmem:[%s395] sm:$0x1]
      %v630 = vmul.f32 %v592, %v592
      %v631 = vmul.f32 %v598, %v598
      %v632 = vadd.f32 %v630, %v631
      %633 = vadd.xlane.f32.xlu0 %v632
      %v634 = vpop.xlane.xlu0 %633
      %v635 = vadd.f32 %v629, %v634
      %636 = vst.msk [vmem:[%s395] sm:$0x1] %vm627, %v635
      %s637 = smul.u32 2, %s25
      %p638 = scmp.lt.s32.totalorder %s24, 1
      %s639 = scalar_select %p638, %s24, 1
      %p640 = scmp.lt.s32.totalorder %s637, 1
      %s641 = scalar_select %p640, %s637, 1
      %s642 = smul.addr %s639, 2
      %s643 = sadd.s32 %s641, %s642
      %s644 = scalar_lea.vmem %s6, %s643
      %p645 = scmp.lt.s32.totalorder %s24, 1
      %s646 = scalar_select %p645, %s24, 1
      %s647 = scalar_lea.vmem %s7, %s646
      %p648 = scmp.lt.s32.totalorder %s24, 1
      %s649 = scalar_select %p648, %s24, 1
      %s650 = scalar_lea.vmem %s8, %s649
      // Predicated region
      $region49: #{attention_block.4} parent=43 // pred_check
        %p651 = pneg %p192
      $region50: #{attention_block.4} parent=43 // pred_check_branch
        %653 = sbr.rel (%p651) target = $region52
      $region51: #{attention_block.4} parent=43 // pred_region
        %s654 = smul.u32 2, %s25
      $region52: #{attention_block.4} parent=43 // pred_fallthru
        _
      // Predicated region
      $region53: #{attention_block.4} parent=43 // pred_check
        %p655 = pneg %p218
      $region54: #{attention_block.4} parent=43 // pred_check_branch
        %657 = sbr.rel (%p655) target = $region56
      $region55: #{attention_block.4} parent=43 // pred_region
        _
      $region56: #{attention_block.4} parent=43 // pred_fallthru
        _
      // Predicated region
      $region57: #{attention_block.4} parent=43 // pred_check
        %p658 = pneg %p244
      $region58: #{attention_block.4} parent=43 // pred_check_branch
        %660 = sbr.rel (%p658) target = $region60
      $region59: #{attention_block.4} parent=43 // pred_region
        _
      $region60: #{attention_block.4} parent=43 // pred_fallthru
        _
    $region44: #{attention_block.4} parent=5 // pred_fallthru
      _
    %p661 = scmp.le.s32.totalorder 2, %s15
    // Predicated region
    $region61: #{attention_block.4} parent=5 // pred_check
      %p662 = pneg %p661
    $region62: #{attention_block.4} parent=5 // pred_check_branch
      %664 = sbr.rel (%p662) target = $region64
    $region63: #{attention_block.4} parent=5 // pred_region
      %s665 = ssub.s32 %s15, 2
      // Predicated region
      $region65: #{attention_block.4} parent=63 // pred_check
        %p666 = pneg %p198
      $region66: #{attention_block.4} parent=63 // pred_check_branch
        %668 = sbr.rel (%p666) target = $region68
      $region67: #{attention_block.4} parent=63 // pred_region
        %s669 = smul.u32 2, %s27
        %p670 = scmp.lt.s32.totalorder %s26, 1
        %s671 = scalar_select %p670, %s26, 1
        %p672 = scmp.lt.s32.totalorder %s669, 1
        %s673 = scalar_select %p672, %s669, 1
        %s674 = smul.addr %s671, 2
        %s675 = sadd.s32 %s673, %s674
        %s676 = scalar_lea.vmem %s6, %s675
      $region68: #{attention_block.4} parent=63 // pred_fallthru
        _
      // Predicated region
      $region69: #{attention_block.4} parent=63 // pred_check
        %p677 = pneg %p224
      $region70: #{attention_block.4} parent=63 // pred_check_branch
        %679 = sbr.rel (%p677) target = $region72
      $region71: #{attention_block.4} parent=63 // pred_region
        %p680 = scmp.lt.s32.totalorder %s26, 1
        %s681 = scalar_select %p680, %s26, 1
        %s682 = scalar_lea.vmem %s7, %s681
      $region72: #{attention_block.4} parent=63 // pred_fallthru
        _
      // Predicated region
      $region73: #{attention_block.4} parent=63 // pred_check
        %p683 = pneg %p250
      $region74: #{attention_block.4} parent=63 // pred_check_branch
        %685 = sbr.rel (%p683) target = $region76
      $region75: #{attention_block.4} parent=63 // pred_region
        %p686 = scmp.lt.s32.totalorder %s26, 1
        %s687 = scalar_select %p686, %s26, 1
        %s688 = scalar_lea.vmem %s8, %s687
      $region76: #{attention_block.4} parent=63 // pred_fallthru
        _
    $region64: #{attention_block.4} parent=5 // pred_fallthru
      _
  $region6: #{attention_block.4} parent=0 // loop_footer
    %s19 = sadd.s32 1, %s15
  $region7: #{attention_block.4} parent=0 // loop_footer_branch
    %14 = sbr.rel target = $region3
  $region8: #{attention_block.4} parent=0 // loop_exit
    _

// kernel: attention_block.3
$region0: #{attention_block.3}
  #allocation0 [shape = 'u32[]', space=smem, size = 0x4, offset = 0x4, fixed_abs, tag = 'smem constant byte address 0x4 - core index']
  #allocation1 [shape = 'u32[144,128]{1,0:T(1,128)}', space=vmem, size = 0x12000, scoped, tag = 'internal scratch']
  %s0 = inlined_call_operand.vmem [shape: f32[2,4,256], index: 0, kind: input, shape index: {}]
  %s1 = inlined_call_operand.vmem [shape: f32[2,4,256], index: 1, kind: input, shape index: {}]
  %s2 = inlined_call_operand.vmem [shape: f32[8,4], index: 2, kind: input, shape index: {}]
  %s3 = inlined_call_operand.vmem [shape: f32[8,4], index: 3, kind: input, shape index: {}]
  %s4 = inlined_call_operand.vmem [shape: f32[2,8,1], index: 4, kind: output, shape index: {0}]
  %s5 = inlined_call_operand.vmem [shape: f32[2,8,1], index: 5, kind: output, shape index: {1}]
  %s6 = inlined_call_operand.vmem [shape: f32[2,8,1], index: 6, kind: output, shape index: {2}]
  %s7 = inlined_call_operand.vmem [shape: f32[2,8,1], index: 7, kind: output, shape index: {3}]
  %8 = xla_tuple %s4, %s5, %s6, %s7
  %s9 = sld [smem:[#allocation0]]
  $region77: #{attention_block.3} parent=0
    _
  %s11 = ssub.s32 1, %s9
  %s12 = scalar_select 0, %s11, %s9
  loop: start=0, step=1, limit=4
  $region2: #{attention_block.3} parent=0 // loop_pre_header
    _
  $region3: #{attention_block.3} parent=0 // loop_header
    %s14 = sphi 0, %s18
    %p15 = scmp.ge.s32.totalorder %s14, 4
    %s21 = sphi 0, %s33
    %s22 = sphi 0, %s29
    %s23 = sphi 0, %s21
    %s24 = sphi 0, %s22
    %s25 = sphi 0, %s23
    %s26 = sphi 0, %s24
    %s38 = sphi 0, %s40
    %s41 = sphi 0, %s38
    %s42 = sphi 0, %s41
    %s58 = sphi 0, %s42
    %s66 = sphi 0, %s68
    %s69 = sphi 0, %s66
    %s70 = sphi 0, %s69
    %s86 = sphi 0, %s70
    %s90 = sphi 0, %s90
    %s92 = sphi 0, %s90
    %s93 = sphi 0, %s92
    %s107 = sphi 0, %s93
    %s111 = sphi 0, %s111
    %s113 = sphi 0, %s111
    %s114 = sphi 0, %s113
    %s128 = sphi 0, %s114
    %s134 = sphi 0, %s136
    %s137 = sphi 0, %s134
    %s138 = sphi 0, %s137
    %s154 = sphi 0, %s138
    %s160 = sphi 0, %s162
    %s163 = sphi 0, %s160
    %s164 = sphi 0, %s163
    %s180 = sphi 0, %s164
    %s186 = sphi 0, %s188
    %s189 = sphi 0, %s186
    %s190 = sphi 0, %s189
    %s206 = sphi 0, %s190
    %s212 = sphi 0, %s214
    %s215 = sphi 0, %s212
    %s216 = sphi 0, %s215
    %s232 = sphi 0, %s216
  $region4: #{attention_block.3} parent=0 // loop_header_branch
    %17 = sbr.rel (%p15) target = $region8
  $region5: #{attention_block.3} parent=0 // loop_body
    %s19 = ssub.s32 %s14, 1
    %s20 = ssub.s32 %s14, 2
    %s27 = sadd.s32 1, %s22
    %p28 = scmp.ge.s32.totalorder %s27, 1
    %s29 = scalar_select %p28, 0, %s27
    %s30 = sadd.s32 1, %s21
    %s31 = scalar_select %p28, %s30, %s21
    %p32 = scmp.ge.s32.totalorder %s31, 2
    %s33 = scalar_select %p32, 0, %s31
    %s34 = ssub.s32 %s21, %s33
    %s35 = ssub.s32 %s22, %s29
    %s36 = sor.u32 %s34, %s35
    %p37 = scmp.eq.s32.totalorder %s36, 0
    %s39 = sadd.s32 %s38, 1
    %s40 = scalar_select %p37, %s38, %s39
    %p43 = pneg %p37
    %p44 = scmp.eq.s32.totalorder %s14, 1
    %p45 = por %p43, %p44
    %p46 = scmp.ne.s32.totalorder %s38, %s41
    %p47 = scmp.eq.s32.totalorder %s14, 0
    %p48 = por %p46, %p47
    %p49 = scmp.ne.s32.totalorder %s38, %s41
    %p50 = scmp.eq.s32.totalorder %s19, 1
    %p51 = por %p49, %p50
    %p52 = scmp.ne.s32.totalorder %s41, %s42
    %p53 = scmp.eq.s32.totalorder %s19, 0
    %p54 = por %p52, %p53
    %p55 = scmp.ne.s32.totalorder %s41, %s42
    %p56 = scmp.eq.s32.totalorder %s20, 1
    %p57 = por %p55, %p56
    %p59 = scmp.ne.s32.totalorder %s42, %s58
    %p60 = scmp.eq.s32.totalorder %s20, 0
    %p61 = por %p59, %p60
    %s62 = ssub.s32 %s21, %s33
    %s63 = ssub.s32 %s22, %s29
    %s64 = sor.u32 %s62, %s63
    %p65 = scmp.eq.s32.totalorder %s64, 0
    %s67 = sadd.s32 %s66, 1
    %s68 = scalar_select %p65, %s66, %s67
    %p71 = pneg %p65
    %p72 = scmp.eq.s32.totalorder %s14, 1
    %p73 = por %p71, %p72
    %p74 = scmp.ne.s32.totalorder %s66, %s69
    %p75 = scmp.eq.s32.totalorder %s14, 0
    %p76 = por %p74, %p75
    %p77 = scmp.ne.s32.totalorder %s66, %s69
    %p78 = scmp.eq.s32.totalorder %s19, 1
    %p79 = por %p77, %p78
    %p80 = scmp.ne.s32.totalorder %s69, %s70
    %p81 = scmp.eq.s32.totalorder %s19, 0
    %p82 = por %p80, %p81
    %p83 = scmp.ne.s32.totalorder %s69, %s70
    %p84 = scmp.eq.s32.totalorder %s20, 1
    %p85 = por %p83, %p84
    %p87 = scmp.ne.s32.totalorder %s70, %s86
    %p88 = scmp.eq.s32.totalorder %s20, 0
    %p89 = por %p87, %p88
    %s91 = sadd.s32 %s90, 1
    %p94 = scmp.eq.s32.totalorder %s14, 1
    %p95 = scmp.ne.s32.totalorder %s90, %s92
    %p96 = scmp.eq.s32.totalorder %s14, 0
    %p97 = por %p95, %p96
    %p98 = scmp.ne.s32.totalorder %s90, %s92
    %p99 = scmp.eq.s32.totalorder %s19, 1
    %p100 = por %p98, %p99
    %p101 = scmp.ne.s32.totalorder %s92, %s93
    %p102 = scmp.eq.s32.totalorder %s19, 0
    %p103 = por %p101, %p102
    %p104 = scmp.ne.s32.totalorder %s92, %s93
    %p105 = scmp.eq.s32.totalorder %s20, 1
    %p106 = por %p104, %p105
    %p108 = scmp.ne.s32.totalorder %s93, %s107
    %p109 = scmp.eq.s32.totalorder %s20, 0
    %p110 = por %p108, %p109
    %s112 = sadd.s32 %s111, 1
    %p115 = scmp.eq.s32.totalorder %s14, 1
    %p116 = scmp.ne.s32.totalorder %s111, %s113
    %p117 = scmp.eq.s32.totalorder %s14, 0
    %p118 = por %p116, %p117
    %p119 = scmp.ne.s32.totalorder %s111, %s113
    %p120 = scmp.eq.s32.totalorder %s19, 1
    %p121 = por %p119, %p120
    %p122 = scmp.ne.s32.totalorder %s113, %s114
    %p123 = scmp.eq.s32.totalorder %s19, 0
    %p124 = por %p122, %p123
    %p125 = scmp.ne.s32.totalorder %s113, %s114
    %p126 = scmp.eq.s32.totalorder %s20, 1
    %p127 = por %p125, %p126
    %p129 = scmp.ne.s32.totalorder %s114, %s128
    %p130 = scmp.eq.s32.totalorder %s20, 0
    %p131 = por %p129, %p130
    %s132 = ssub.s32 %s21, %s33
    %p133 = scmp.eq.s32.totalorder %s132, 0
    %s135 = sadd.s32 %s134, 1
    %s136 = scalar_select %p133, %s134, %s135
    %p139 = pneg %p133
    %p140 = scmp.eq.s32.totalorder %s14, 1
    %p141 = por %p139, %p140
    %p142 = scmp.ne.s32.totalorder %s134, %s137
    %p143 = scmp.eq.s32.totalorder %s14, 0
    %p144 = por %p142, %p143
    %p145 = scmp.ne.s32.totalorder %s134, %s137
    %p146 = scmp.eq.s32.totalorder %s19, 1
    %p147 = por %p145, %p146
    %p148 = scmp.ne.s32.totalorder %s137, %s138
    %p149 = scmp.eq.s32.totalorder %s19, 0
    %p150 = por %p148, %p149
    %p151 = scmp.ne.s32.totalorder %s137, %s138
    %p152 = scmp.eq.s32.totalorder %s20, 1
    %p153 = por %p151, %p152
    %p155 = scmp.ne.s32.totalorder %s138, %s154
    %p156 = scmp.eq.s32.totalorder %s20, 0
    %p157 = por %p155, %p156
    %s158 = ssub.s32 %s21, %s33
    %p159 = scmp.eq.s32.totalorder %s158, 0
    %s161 = sadd.s32 %s160, 1
    %s162 = scalar_select %p159, %s160, %s161
    %p165 = pneg %p159
    %p166 = scmp.eq.s32.totalorder %s14, 1
    %p167 = por %p165, %p166
    %p168 = scmp.ne.s32.totalorder %s160, %s163
    %p169 = scmp.eq.s32.totalorder %s14, 0
    %p170 = por %p168, %p169
    %p171 = scmp.ne.s32.totalorder %s160, %s163
    %p172 = scmp.eq.s32.totalorder %s19, 1
    %p173 = por %p171, %p172
    %p174 = scmp.ne.s32.totalorder %s163, %s164
    %p175 = scmp.eq.s32.totalorder %s19, 0
    %p176 = por %p174, %p175
    %p177 = scmp.ne.s32.totalorder %s163, %s164
    %p178 = scmp.eq.s32.totalorder %s20, 1
    %p179 = por %p177, %p178
    %p181 = scmp.ne.s32.totalorder %s164, %s180
    %p182 = scmp.eq.s32.totalorder %s20, 0
    %p183 = por %p181, %p182
    %s184 = ssub.s32 %s21, %s33
    %p185 = scmp.eq.s32.totalorder %s184, 0
    %s187 = sadd.s32 %s186, 1
    %s188 = scalar_select %p185, %s186, %s187
    %p191 = pneg %p185
    %p192 = scmp.eq.s32.totalorder %s14, 1
    %p193 = por %p191, %p192
    %p194 = scmp.ne.s32.totalorder %s186, %s189
    %p195 = scmp.eq.s32.totalorder %s14, 0
    %p196 = por %p194, %p195
    %p197 = scmp.ne.s32.totalorder %s186, %s189
    %p198 = scmp.eq.s32.totalorder %s19, 1
    %p199 = por %p197, %p198
    %p200 = scmp.ne.s32.totalorder %s189, %s190
    %p201 = scmp.eq.s32.totalorder %s19, 0
    %p202 = por %p200, %p201
    %p203 = scmp.ne.s32.totalorder %s189, %s190
    %p204 = scmp.eq.s32.totalorder %s20, 1
    %p205 = por %p203, %p204
    %p207 = scmp.ne.s32.totalorder %s190, %s206
    %p208 = scmp.eq.s32.totalorder %s20, 0
    %p209 = por %p207, %p208
    %s210 = ssub.s32 %s21, %s33
    %p211 = scmp.eq.s32.totalorder %s210, 0
    %s213 = sadd.s32 %s212, 1
    %s214 = scalar_select %p211, %s212, %s213
    %p217 = pneg %p211
    %p218 = scmp.eq.s32.totalorder %s14, 1
    %p219 = por %p217, %p218
    %p220 = scmp.ne.s32.totalorder %s212, %s215
    %p221 = scmp.eq.s32.totalorder %s14, 0
    %p222 = por %p220, %p221
    %p223 = scmp.ne.s32.totalorder %s212, %s215
    %p224 = scmp.eq.s32.totalorder %s19, 1
    %p225 = por %p223, %p224
    %p226 = scmp.ne.s32.totalorder %s215, %s216
    %p227 = scmp.eq.s32.totalorder %s19, 0
    %p228 = por %p226, %p227
    %p229 = scmp.ne.s32.totalorder %s215, %s216
    %p230 = scmp.eq.s32.totalorder %s20, 1
    %p231 = por %p229, %p230
    %p233 = scmp.ne.s32.totalorder %s216, %s232
    %p234 = scmp.eq.s32.totalorder %s20, 0
    %p235 = por %p233, %p234
    %p236 = scmp.le.s32.totalorder 1, %s14
    %p237 = scmp.lt.s32.totalorder %s14, 3
    %p238 = pnand %p236, %p237
    %p239 = pneg %p238
    // Predicated region
    $region9: #{attention_block.3} parent=5 // pred_check
      _
    $region10: #{attention_block.3} parent=5 // pred_check_branch
      %241 = sbr.rel (%p238) target = $region12
    $region11: #{attention_block.3} parent=5 // pred_region
      %s242 = ssub.s32 %s14, 1
      // Predicated region
      $region13: #{attention_block.3} parent=11 // pred_check
        %p243 = pneg %p103
      $region14: #{attention_block.3} parent=11 // pred_check_branch
        %245 = sbr.rel (%p243) target = $region16
      $region15: #{attention_block.3} parent=11 // pred_region
        _
      $region16: #{attention_block.3} parent=11 // pred_fallthru
        _
      // Predicated region
      $region17: #{attention_block.3} parent=11 // pred_check
        %p246 = pneg %p124
      $region18: #{attention_block.3} parent=11 // pred_check_branch
        %248 = sbr.rel (%p246) target = $region20
      $region19: #{attention_block.3} parent=11 // pred_region
        _
      $region20: #{attention_block.3} parent=11 // pred_fallthru
        _
    $region12: #{attention_block.3} parent=5 // pred_fallthru
      _
    %p249 = scmp.lt.s32.totalorder %s14, 2
    // Predicated region
    $region21: #{attention_block.3} parent=5 // pred_check
      %p250 = pneg %p249
    $region22: #{attention_block.3} parent=5 // pred_check_branch
      %252 = sbr.rel (%p250) target = $region24
    $region23: #{attention_block.3} parent=5 // pred_region
      // Predicated region
      $region25: #{attention_block.3} parent=23 // pred_check
        %p253 = pneg %p48
      $region26: #{attention_block.3} parent=23 // pred_check_branch
        %255 = sbr.rel (%p253) target = $region28
      $region27: #{attention_block.3} parent=23 // pred_region
        %s256 = smul.u32 2, %s22
        %p257 = scmp.lt.s32.totalorder %s21, 1
        %s258 = scalar_select %p257, %s21, 1
        %p259 = scmp.lt.s32.totalorder %s256, 1
        %s260 = scalar_select %p259, %s256, 1
        %s261 = smul.addr %s258, 2
        %s262 = sadd.s32 %s260, %s261
        %s263 = smul.addr %s262, 4
        %s264 = scalar_lea.vmem %s0, %s263
        %s265 = smul.u32 2, %s22
      $region28: #{attention_block.3} parent=23 // pred_fallthru
        _
      // Predicated region
      $region29: #{attention_block.3} parent=23 // pred_check
        %p266 = pneg %p76
      $region30: #{attention_block.3} parent=23 // pred_check_branch
        %268 = sbr.rel (%p266) target = $region32
      $region31: #{attention_block.3} parent=23 // pred_region
        %s269 = smul.u32 2, %s22
        %p270 = scmp.lt.s32.totalorder %s21, 1
        %s271 = scalar_select %p270, %s21, 1
        %p272 = scmp.lt.s32.totalorder %s269, 1
        %s273 = scalar_select %p272, %s269, 1
        %s274 = smul.addr %s271, 2
        %s275 = sadd.s32 %s273, %s274
        %s276 = smul.addr %s275, 4
        %s277 = scalar_lea.vmem %s1, %s276
        %s278 = smul.u32 2, %s22
      $region32: #{attention_block.3} parent=23 // pred_fallthru
        _
    $region24: #{attention_block.3} parent=5 // pred_fallthru
      _
    %p279 = scmp.le.s32.totalorder 1, %s14
    %p280 = scmp.lt.s32.totalorder %s14, 3
    %p281 = pnand %p279, %p280
    %p282 = pneg %p281
    // Predicated region
    $region33: #{attention_block.3} parent=5 // pred_check
      _
    $region34: #{attention_block.3} parent=5 // pred_check_branch
      %284 = sbr.rel (%p281) target = $region36
    $region35: #{attention_block.3} parent=5 // pred_region
      %s285 = ssub.s32 %s14, 1
      %s286 = smul.u32 2, %s24
      %p287 = scmp.lt.s32.totalorder %s23, 1
      %s288 = scalar_select %p287, %s23, 1
      %p289 = scmp.lt.s32.totalorder %s286, 1
      %s290 = scalar_select %p289, %s286, 1
      %s291 = smul.addr %s288, 2
      %s292 = sadd.s32 %s290, %s291
      %s293 = smul.addr %s292, 4
      %s294 = scalar_lea.vmem %s0, %s293
      %p295 = pneg %p54
      %p296 = pneg %p51
      %s297 = smul.u32 2, %s24
      %p298 = scmp.lt.s32.totalorder %s23, 1
      %s299 = scalar_select %p298, %s23, 1
      %p300 = scmp.lt.s32.totalorder %s297, 1
      %s301 = scalar_select %p300, %s297, 1
      %s302 = smul.addr %s299, 2
      %s303 = sadd.s32 %s301, %s302
      %s304 = smul.addr %s303, 4
      %s305 = scalar_lea.vmem %s1, %s304
      %p306 = pneg %p82
      %p307 = pneg %p79
      %p308 = pneg %p103
      %p309 = pneg %p100
      %p310 = pneg %p124
      %p311 = pneg %p121
      %p312 = pneg %p150
      %p313 = pneg %p147
      %p314 = scmp.lt.s32.totalorder %s23, 1
      %s315 = scalar_select %p314, %s23, 1
      %s316 = smul.addr %s315, 8
      %s317 = scalar_lea.vmem %s4, %s316
      %p318 = pneg %p176
      %p319 = pneg %p173
      %p320 = scmp.lt.s32.totalorder %s23, 1
      %s321 = scalar_select %p320, %s23, 1
      %s322 = smul.addr %s321, 8
      %s323 = scalar_lea.vmem %s5, %s322
      %p324 = pneg %p202
      %p325 = pneg %p199
      %p326 = scmp.lt.s32.totalorder %s23, 1
      %s327 = scalar_select %p326, %s23, 1
      %s328 = smul.addr %s327, 8
      %s329 = scalar_lea.vmem %s6, %s328
      %p330 = pneg %p228
      %p331 = pneg %p225
      %p332 = scmp.lt.s32.totalorder %s23, 1
      %s333 = scalar_select %p332, %s23, 1
      %s334 = smul.addr %s333, 8
      %s335 = scalar_lea.vmem %s7, %s334
      %s336 = smul.u32 2, %s24
      %p337 = scmp.lt.s32.totalorder %s23, 1
      %s338 = scalar_select %p337, %s23, 1
      %p339 = scmp.lt.s32.totalorder %s336, 1
      %s340 = scalar_select %p339, %s336, 1
      %s341 = smul.addr %s338, 2
      %s342 = sadd.s32 %s340, %s341
      %s343 = smul.addr %s342, 4
      %s344 = scalar_lea.vmem %s0, %s343
      %s345 = smul.u32 2, %s24
      %s346 = smul.u32 2, %s24
      %p347 = scmp.lt.s32.totalorder %s23, 1
      %s348 = scalar_select %p347, %s23, 1
      %p349 = scmp.lt.s32.totalorder %s346, 1
      %s350 = scalar_select %p349, %s346, 1
      %s351 = smul.addr %s348, 2
      %s352 = sadd.s32 %s350, %s351
      %s353 = smul.addr %s352, 4
      %s354 = scalar_lea.vmem %s1, %s353
      %s355 = smul.u32 2, %s24
      %p356 = scmp.lt.s32.totalorder %s23, 1
      %s357 = scalar_select %p356, %s23, 1
      %s358 = smul.addr %s357, 8
      %s359 = scalar_lea.vmem %s4, %s358
      %p360 = scmp.lt.s32.totalorder %s23, 1
      %s361 = scalar_select %p360, %s23, 1
      %s362 = smul.addr %s361, 8
      %s363 = scalar_lea.vmem %s5, %s362
      %p364 = scmp.lt.s32.totalorder %s23, 1
      %s365 = scalar_select %p364, %s23, 1
      %s366 = smul.addr %s365, 8
      %s367 = scalar_lea.vmem %s6, %s366
      %p368 = scmp.lt.s32.totalorder %s23, 1
      %s369 = scalar_select %p368, %s23, 1
      %s370 = smul.addr %s369, 8
      %s371 = scalar_lea.vmem %s7, %s370
      %p372 = scmp.eq.s32.totalorder %s24, 0
      // Predicated region
      $region37: #{attention_block.3} parent=35 // pred_check
        %p373 = pneg %p372
      $region38: #{attention_block.3} parent=35 // pred_check_branch
        %375 = sbr.rel (%p373) target = $region40
      $region39: #{attention_block.3} parent=35 // pred_region
        %vm376 = vcmask 7168
        %377 = vst.msk [vmem:[%s359] sm:$0xff] %vm376, 0.0
        %378 = vst.msk [vmem:[%s363] sm:$0xff] %vm376, 0.0
        %379 = vst.msk [vmem:[%s367] sm:$0xff] %vm376, 0.0
        %380 = vst.msk [vmem:[%s371] sm:$0xff] %vm376, 0.0
      $region40: #{attention_block.3} parent=35 // pred_fallthru
        _
      %v381 = vld [vmem:[%s2] sm:$0xff]
      %v382 = vld [vmem:[%s344] sm:$0xff]
      %v384 = vcombine.high %v382, %v382
      %vm385 = vcmask 31744
      %v387 = vsel %vm385, %v381, 0
      %vm389 = vcmask 1043456
      %v390 = vsel %vm389, %v382, 0
      %v392 = vsel %vm389, %v384, 0
      %394 = vmatprep.subr.mxu0 0.0
      %395 = vmatpush1.msra.mxu0 0.0
      %396 = vmatprep.subr.mxu0 0.0
      %397 = vmatpush1.msra.mxu0 0.0
      %398 = vmatprep.subr.mxu0 0.0
      %399 = vmatpush1.msra.mxu0 0.0
      %400 = vmatprep.subr.mxu0 0.0
      %401 = vmatpush1.msra.mxu0 0.0
      %402 = vmatprep.subr.mxu0 0.0
      %403 = vmatpush1.msra.mxu0 0.0
      %404 = vmatprep.subr.mxu0 0.0
      %405 = vmatpush1.msra.mxu0 0.0
      %406 = vmatprep.subr.mxu0 0.0
      %407 = vmatpush1.msra.mxu0 0.0
      %408 = vmatprep.subr.mxu0 0.0
      %409 = vmatpush1.msra.mxu0 0.0
      %410 = vmatprep.subr.mxu0 0.0
      %411 = vmatpush1.msra.mxu0 0.0
      %412 = vmatprep.subr.mxu0 0.0
      %413 = vmatpush1.msra.mxu0 0.0
      %414 = vmatprep.subr.mxu0 0.0
      %415 = vmatpush1.msra.mxu0 0.0
      %416 = vmatprep.subr.mxu0 0.0
      %417 = vmatpush1.msra.mxu0 0.0
      %418 = vmatprep.subr.mxu0 0.0
      %419 = vmatpush1.msra.mxu0 0.0
      %420 = vmatprep.subr.mxu0 0.0
      %421 = vmatpush1.msra.mxu0 0.0
      %422 = vmatprep.subr.mxu0 0.0
      %423 = vmatpush1.msra.mxu0 0.0
      %424 = vmatprep.subr.mxu0 %v392
      %425 = vmatpush1.msra.mxu0 %v390
      %426 = vmatprep.subr.mxu0 0.0
      %427 = vmatpush2.msra.mxu0 0.0
      %428 = vmatprep.subr.mxu0 0.0
      %429 = vmatpush2.msra.mxu0 0.0
      %430 = vmatprep.subr.mxu0 0.0
      %431 = vmatpush2.msra.mxu0 0.0
      %432 = vmatprep.subr.mxu0 0.0
      %433 = vmatpush2.msra.mxu0 0.0
      %434 = vmatprep.subr.mxu0 0.0
      %435 = vmatpush2.msra.mxu0 0.0
      %436 = vmatprep.subr.mxu0 0.0
      %437 = vmatpush2.msra.mxu0 0.0
      %438 = vmatprep.subr.mxu0 0.0
      %439 = vmatpush2.msra.mxu0 0.0
      %440 = vmatprep.subr.mxu0 0.0
      %441 = vmatpush2.msra.mxu0 0.0
      %442 = vmatprep.subr.mxu0 0.0
      %443 = vmatpush2.msra.mxu0 0.0
      %444 = vmatprep.subr.mxu0 0.0
      %445 = vmatpush2.msra.mxu0 0.0
      %446 = vmatprep.subr.mxu0 0.0
      %447 = vmatpush2.msra.mxu0 0.0
      %448 = vmatprep.subr.mxu0 0.0
      %449 = vmatpush2.msra.mxu0 0.0
      %450 = vmatprep.subr.mxu0 0.0
      %451 = vmatpush2.msra.mxu0 0.0
      %452 = vmatprep.subr.mxu0 0.0
      %453 = vmatpush2.msra.mxu0 0.0
      %454 = vmatprep.subr.mxu0 0.0
      %455 = vmatpush2.msra.mxu0 0.0
      %456 = vmatprep.subr.mxu0 0.0
      %457 = vmatpush2.msra.mxu0 0.0
      %458 = vmatprep.mubr.f32.mxu0 0.0
      %459 = vmatmul.mubr.f32.gmra.mxu0 %v387
      %v460 = vpop.f32.mrf.mxu0
      %v461 = vadd.f32 0.0, %v460
      %v462 = vpop.f32.mrf.mxu0
      %v463 = vadd.f32 0.0, %v462
      %464 = vdwg.mxu0
      %v465 = vld [vmem:[%s3] sm:$0xff]
      %v466 = vld [vmem:[%s354] sm:$0xff]
      %v468 = vcombine.high %v466, %v466
      %v470 = vsel %vm385, %v465, 0
      %v472 = vsel %vm389, %v466, 0
      %v474 = vsel %vm389, %v468, 0
      %476 = vmatprep.subr.mxu0 0.0
      %477 = vmatpush1.msra.mxu0 0.0
      %478 = vmatprep.subr.mxu0 0.0
      %479 = vmatpush1.msra.mxu0 0.0
      %480 = vmatprep.subr.mxu0 0.0
      %481 = vmatpush1.msra.mxu0 0.0
      %482 = vmatprep.subr.mxu0 0.0
      %483 = vmatpush1.msra.mxu0 0.0
      %484 = vmatprep.subr.mxu0 0.0
      %485 = vmatpush1.msra.mxu0 0.0
      %486 = vmatprep.subr.mxu0 0.0
      %487 = vmatpush1.msra.mxu0 0.0
      %488 = vmatprep.subr.mxu0 0.0
      %489 = vmatpush1.msra.mxu0 0.0
      %490 = vmatprep.subr.mxu0 0.0
      %491 = vmatpush1.msra.mxu0 0.0
      %492 = vmatprep.subr.mxu0 0.0
      %493 = vmatpush1.msra.mxu0 0.0
      %494 = vmatprep.subr.mxu0 0.0
      %495 = vmatpush1.msra.mxu0 0.0
      %496 = vmatprep.subr.mxu0 0.0
      %497 = vmatpush1.msra.mxu0 0.0
      %498 = vmatprep.subr.mxu0 0.0
      %499 = vmatpush1.msra.mxu0 0.0
      %500 = vmatprep.subr.mxu0 0.0
      %501 = vmatpush1.msra.mxu0 0.0
      %502 = vmatprep.subr.mxu0 0.0
      %503 = vmatpush1.msra.mxu0 0.0
      %504 = vmatprep.subr.mxu0 0.0
      %505 = vmatpush1.msra.mxu0 0.0
      %506 = vmatprep.subr.mxu0 %v474
      %507 = vmatpush1.msra.mxu0 %v472
      %508 = vmatprep.subr.mxu0 0.0
      %509 = vmatpush2.msra.mxu0 0.0
      %510 = vmatprep.subr.mxu0 0.0
      %511 = vmatpush2.msra.mxu0 0.0
      %512 = vmatprep.subr.mxu0 0.0
      %513 = vmatpush2.msra.mxu0 0.0
      %514 = vmatprep.subr.mxu0 0.0
      %515 = vmatpush2.msra.mxu0 0.0
      %516 = vmatprep.subr.mxu0 0.0
      %517 = vmatpush2.msra.mxu0 0.0
      %518 = vmatprep.subr.mxu0 0.0
      %519 = vmatpush2.msra.mxu0 0.0
      %520 = vmatprep.subr.mxu0 0.0
      %521 = vmatpush2.msra.mxu0 0.0
      %522 = vmatprep.subr.mxu0 0.0
      %523 = vmatpush2.msra.mxu0 0.0
      %524 = vmatprep.subr.mxu0 0.0
      %525 = vmatpush2.msra.mxu0 0.0
      %526 = vmatprep.subr.mxu0 0.0
      %527 = vmatpush2.msra.mxu0 0.0
      %528 = vmatprep.subr.mxu0 0.0
      %529 = vmatpush2.msra.mxu0 0.0
      %530 = vmatprep.subr.mxu0 0.0
      %531 = vmatpush2.msra.mxu0 0.0
      %532 = vmatprep.subr.mxu0 0.0
      %533 = vmatpush2.msra.mxu0 0.0
      %534 = vmatprep.subr.mxu0 0.0
      %535 = vmatpush2.msra.mxu0 0.0
      %536 = vmatprep.subr.mxu0 0.0
      %537 = vmatpush2.msra.mxu0 0.0
      %538 = vmatprep.subr.mxu0 0.0
      %539 = vmatpush2.msra.mxu0 0.0
      %540 = vmatprep.mubr.f32.mxu0 0.0
      %541 = vmatmul.mubr.f32.gmra.mxu0 %v470
      %v542 = vpop.f32.mrf.mxu0
      %v543 = vadd.f32 0.0, %v542
      %v544 = vpop.f32.mrf.mxu0
      %v545 = vadd.f32 0.0, %v544
      %546 = vdwg.mxu0
      %v547 = vld [vmem:[%s359] sm:$0xff]
      %v548 = vadd.f32 %v461, %v463
      %549 = vadd.xlane.f32.xlu0 %v548
      %v550 = vpop.xlane.xlu0 %549
      %v551 = vadd.f32 %v547, %v550
      %vm552 = vcmask 7168
      %553 = vst.msk [vmem:[%s359] sm:$0xff] %vm552, %v551
      %v554 = vld [vmem:[%s363] sm:$0xff]
      %v555 = vmul.f32 %v461, %v461
      %v556 = vmul.f32 %v463, %v463
      %v557 = vadd.f32 %v555, %v556
      %558 = vadd.xlane.f32.xlu0 %v557
      %v559 = vpop.xlane.xlu0 %558
      %v560 = vadd.f32 %v554, %v559
      %561 = vst.msk [vmem:[%s363] sm:$0xff] %vm552, %v560
      %v562 = vld [vmem:[%s367] sm:$0xff]
      %v563 = vadd.f32 %v543, %v545
      %564 = vadd.xlane.f32.xlu0 %v563
      %v565 = vpop.xlane.xlu0 %564
      %v566 = vadd.f32 %v562, %v565
      %567 = vst.msk [vmem:[%s367] sm:$0xff] %vm552, %v566
      %v568 = vld [vmem:[%s371] sm:$0xff]
      %v569 = vmul.f32 %v543, %v543
      %v570 = vmul.f32 %v545, %v545
      %v571 = vadd.f32 %v569, %v570
      %572 = vadd.xlane.f32.xlu0 %v571
      %v573 = vpop.xlane.xlu0 %572
      %v574 = vadd.f32 %v568, %v573
      %575 = vst.msk [vmem:[%s371] sm:$0xff] %vm552, %v574
      %p576 = scmp.lt.s32.totalorder %s23, 1
      %s577 = scalar_select %p576, %s23, 1
      %s578 = smul.addr %s577, 8
      %s579 = scalar_lea.vmem %s4, %s578
      %p580 = scmp.lt.s32.totalorder %s23, 1
      %s581 = scalar_select %p580, %s23, 1
      %s582 = smul.addr %s581, 8
      %s583 = scalar_lea.vmem %s5, %s582
      %p584 = scmp.lt.s32.totalorder %s23, 1
      %s585 = scalar_select %p584, %s23, 1
      %s586 = smul.addr %s585, 8
      %s587 = scalar_lea.vmem %s6, %s586
      %p588 = scmp.lt.s32.totalorder %s23, 1
      %s589 = scalar_select %p588, %s23, 1
      %s590 = smul.addr %s589, 8
      %s591 = scalar_lea.vmem %s7, %s590
      // Predicated region
      $region41: #{attention_block.3} parent=35 // pred_check
        %p592 = pneg %p147
      $region42: #{attention_block.3} parent=35 // pred_check_branch
        %594 = sbr.rel (%p592) target = $region44
      $region43: #{attention_block.3} parent=35 // pred_region
        _
      $region44: #{attention_block.3} parent=35 // pred_fallthru
        _
      // Predicated region
      $region45: #{attention_block.3} parent=35 // pred_check
        %p595 = pneg %p173
      $region46: #{attention_block.3} parent=35 // pred_check_branch
        %597 = sbr.rel (%p595) target = $region48
      $region47: #{attention_block.3} parent=35 // pred_region
        _
      $region48: #{attention_block.3} parent=35 // pred_fallthru
        _
      // Predicated region
      $region49: #{attention_block.3} parent=35 // pred_check
        %p598 = pneg %p199
      $region50: #{attention_block.3} parent=35 // pred_check_branch
        %600 = sbr.rel (%p598) target = $region52
      $region51: #{attention_block.3} parent=35 // pred_region
        _
      $region52: #{attention_block.3} parent=35 // pred_fallthru
        _
      // Predicated region
      $region53: #{attention_block.3} parent=35 // pred_check
        %p601 = pneg %p225
      $region54: #{attention_block.3} parent=35 // pred_check_branch
        %603 = sbr.rel (%p601) target = $region56
      $region55: #{attention_block.3} parent=35 // pred_region
        _
      $region56: #{attention_block.3} parent=35 // pred_fallthru
        _
    $region36: #{attention_block.3} parent=5 // pred_fallthru
      _
    %p604 = scmp.le.s32.totalorder 2, %s14
    // Predicated region
    $region57: #{attention_block.3} parent=5 // pred_check
      %p605 = pneg %p604
    $region58: #{attention_block.3} parent=5 // pred_check_branch
      %607 = sbr.rel (%p605) target = $region60
    $region59: #{attention_block.3} parent=5 // pred_region
      %s608 = ssub.s32 %s14, 2
      // Predicated region
      $region61: #{attention_block.3} parent=59 // pred_check
        %p609 = pneg %p153
      $region62: #{attention_block.3} parent=59 // pred_check_branch
        %611 = sbr.rel (%p609) target = $region64
      $region63: #{attention_block.3} parent=59 // pred_region
        %p612 = scmp.lt.s32.totalorder %s25, 1
        %s613 = scalar_select %p612, %s25, 1
        %s614 = smul.addr %s613, 8
        %s615 = scalar_lea.vmem %s4, %s614
      $region64: #{attention_block.3} parent=59 // pred_fallthru
        _
      // Predicated region
      $region65: #{attention_block.3} parent=59 // pred_check
        %p616 = pneg %p179
      $region66: #{attention_block.3} parent=59 // pred_check_branch
        %618 = sbr.rel (%p616) target = $region68
      $region67: #{attention_block.3} parent=59 // pred_region
        %p619 = scmp.lt.s32.totalorder %s25, 1
        %s620 = scalar_select %p619, %s25, 1
        %s621 = smul.addr %s620, 8
        %s622 = scalar_lea.vmem %s5, %s621
      $region68: #{attention_block.3} parent=59 // pred_fallthru
        _
      // Predicated region
      $region69: #{attention_block.3} parent=59 // pred_check
        %p623 = pneg %p205
      $region70: #{attention_block.3} parent=59 // pred_check_branch
        %625 = sbr.rel (%p623) target = $region72
      $region71: #{attention_block.3} parent=59 // pred_region
        %p626 = scmp.lt.s32.totalorder %s25, 1
        %s627 = scalar_select %p626, %s25, 1
        %s628 = smul.addr %s627, 8
        %s629 = scalar_lea.vmem %s6, %s628
      $region72: #{attention_block.3} parent=59 // pred_fallthru
        _
      // Predicated region
      $region73: #{attention_block.3} parent=59 // pred_check
        %p630 = pneg %p231
      $region74: #{attention_block.3} parent=59 // pred_check_branch
        %632 = sbr.rel (%p630) target = $region76
      $region75: #{attention_block.3} parent=59 // pred_region
        %p633 = scmp.lt.s32.totalorder %s25, 1
        %s634 = scalar_select %p633, %s25, 1
        %s635 = smul.addr %s634, 8
        %s636 = scalar_lea.vmem %s7, %s635
      $region76: #{attention_block.3} parent=59 // pred_fallthru
        _
    $region60: #{attention_block.3} parent=5 // pred_fallthru
      _
  $region6: #{attention_block.3} parent=0 // loop_footer
    %s18 = sadd.s32 1, %s14
  $region7: #{attention_block.3} parent=0 // loop_footer_branch
    %13 = sbr.rel target = $region3
  $region8: #{attention_block.3} parent=0 // loop_exit
    _

</llo_original>
